<compile_context>
chip_gen: v6e
topology: v6e:2x2x1
jax: 0.10.0
libtpu: 0.0.40
codegen_flags: <defaults>
</compile_context>

<pallas_src>
import jax
import jax.numpy as jnp
from jax.experimental import pallas as pl
from jax.experimental.pallas import tpu as pltpu

LANE = 128


def _round_up(n, m):
    return ((n + m - 1) // m) * m


def _choose_tile_l(L, target=1024):
    """Largest divisor of L that is a multiple of 16 and <= target (else L)."""
    if L <= target:
        return L
    for tl in range(target - target % 16, 15, -16):
        if L % tl == 0:
            return tl
    return L


# ----------------------------------------------------------------------------
# Fused per-layer Pallas kernel
# ----------------------------------------------------------------------------
def make_layer_kernel(*, K, dil, TL, L, Cin_p, Cout_p,
                      apply_in_affine, project, fuse_pool):
    pad = (K - 1) * dil
    n_lt = L // TL

    def kernel(*args):
        it = iter(args)
        x_ref = next(it)                       # (1, L, Cin_p)      bf16
        if apply_in_affine:
            in_scale_ref = next(it)            # (1, Cin_p)         f32
            in_shift_ref = next(it)            # (1, Cin_p)         f32
        w_ref = next(it)                       # (K*Cin_p, Cout_p)  bf16
        shift_ref = next(it)                   # (1, Cout_p)        f32
        if project:
            wres_ref = next(it)                # (Cin_p, Cout_p)    bf16
            bres_ref = next(it)                # (1, Cout_p)        f32
        o_ref = next(it)
        xp_ref = next(it)                      # VMEM scratch (>=pad+TL, Cin_p) bf16
        if fuse_pool:
            acc_ref = next(it)                 # VMEM scratch (1, Cout_p) f32

        li = pl.program_id(1)
        t0 = li * TL

        def in_affine(rows_bf16):
            # Fused BN0 (layer 0 only): elementwise, so the zero halo stays 0.
            if apply_in_affine:
                r = (rows_bf16.astype(jnp.float32) * in_scale_ref[...]
                     + in_shift_ref[...])
                return r.astype(jnp.bfloat16)
            return rows_bf16

        # Fill xp[0 : pad+TL, :] = left-zero-padded x rows [t0-pad, t0+TL).
        @pl.when(li == 0)
        def _():
            rows = in_affine(x_ref[0, 0:TL, :])
            if pad > 0:
                rows = jnp.concatenate(
                    [jnp.zeros((pad, Cin_p), rows.dtype), rows], axis=0)
            xp_ref[0:pad + TL, :] = rows

        if n_lt > 1:
            @pl.when(li > 0)
            def _():
                xp_ref[0:pad + TL, :] = in_affine(
                    x_ref[0, pl.ds(t0 - pad, pad + TL), :])

        # Causal dilated conv as ONE MXU matmul over the im2col operand.
        cols = [xp_ref[k * dil:k * dil + TL, :] for k in range(K)]
        im2col = cols[0] if K == 1 else jnp.concatenate(cols, axis=-1)
        acc = jnp.dot(im2col, w_ref[...], preferred_element_type=jnp.float32)
        out = jnp.maximum(acc + shift_ref[...], 0.0)   # BN scale folded into W

        x_tile = xp_ref[pad:pad + TL, :]               # unpadded rows = block input
        if project:        # Res-connect 1x1 projection (Cin != Cout)
            res = jnp.dot(x_tile, wres_ref[...],
                          preferred_element_type=jnp.float32) + bres_ref[...]
        else:              # identity residual (Cin == Cout)
            res = x_tile.astype(jnp.float32)
        y = out + res                                  # (TL, Cout_p) f32

        if fuse_pool:
            # AdaptiveAvgPool1d(1) fused into the last layer's epilogue.
            @pl.when(li == 0)
            def _():
                acc_ref[...] = jnp.zeros_like(acc_ref)
            acc_ref[...] += jnp.sum(y, axis=0, keepdims=True)

            @pl.when(li == n_lt - 1)
            def _():
                o_ref[0] = (acc_ref[...] * (1.0 / L)).astype(o_ref.dtype)
        else:
            o_ref[0] = y.astype(o_ref.dtype)

    return kernel


def conv_block(x, layer, *, fuse_pool):
    """One fused CasualConvBlock (+BN0 prologue on layer0, +avg-pool on last)."""
    B, L, Cin_p = x.shape
    KC, Cout_p = layer["w"].shape
    K = layer["K"]
    dil = layer["dilation"]
    assert KC == K * Cin_p
    pad = (K - 1) * dil
    project = layer["project"]
    apply_in_affine = "in_scale" in layer

    TL = _choose_tile_l(L)
    if TL < L and TL < pad:       # halo slice needs t0 - pad >= 0 for li > 0
        TL = L
    n_lt = L // TL

    kernel = make_layer_kernel(K=K, dil=dil, TL=TL, L=L, Cin_p=Cin_p,
                               Cout_p=Cout_p, apply_in_affine=apply_in_affine,
                               project=project, fuse_pool=fuse_pool)

    inputs = [x]
    in_specs = [pl.BlockSpec((1, L, Cin_p), lambda b, l: (b, 0, 0))]
    if apply_in_affine:
        inputs += [layer["in_scale"], layer["in_shift"]]
        in_specs += [pl.BlockSpec((1, Cin_p), lambda b, l: (0, 0)),
                     pl.BlockSpec((1, Cin_p), lambda b, l: (0, 0))]
    inputs += [layer["w"], layer["shift"]]
    in_specs += [pl.BlockSpec((K * Cin_p, Cout_p), lambda b, l: (0, 0)),
                 pl.BlockSpec((1, Cout_p), lambda b, l: (0, 0))]
    if project:
        inputs += [layer["wres"], layer["bres"]]
        in_specs += [pl.BlockSpec((Cin_p, Cout_p), lambda b, l: (0, 0)),
                     pl.BlockSpec((1, Cout_p), lambda b, l: (0, 0))]

    scratch = [pltpu.VMEM((_round_up(pad + TL, 16), Cin_p), jnp.bfloat16)]
    if fuse_pool:
        out_shape = jax.ShapeDtypeStruct((B, 1, Cout_p), jnp.float32)
        out_spec = pl.BlockSpec((1, 1, Cout_p), lambda b, l: (b, 0, 0))
        scratch.append(pltpu.VMEM((1, Cout_p), jnp.float32))
        dims = ("parallel", "arbitrary")   # L axis reduces into the pool
    else:
        out_shape = jax.ShapeDtypeStruct((B, L, Cout_p), jnp.bfloat16)
        out_spec = pl.BlockSpec((1, TL, Cout_p), lambda b, l: (b, l, 0))
        dims = ("parallel", "parallel")

    return pl.pallas_call(
        kernel,
        out_shape=out_shape,
        grid_spec=pltpu.PrefetchScalarGridSpec(
            num_scalar_prefetch=0,
            grid=(B, n_lt),
            in_specs=in_specs,
            out_specs=out_spec,
            scratch_shapes=scratch),
        compiler_params=pltpu.CompilerParams(
            dimension_semantics=dims,
            vmem_limit_bytes=64 * 1024 * 1024),
    )(*inputs)


# ----------------------------------------------------------------------------
# Parameter construction (deterministic; folds weight_norm + BN + conv bias)
# ----------------------------------------------------------------------------
def _bn_affine(key, c, eps=1e-5):
    k1, k2, k3, k4 = jax.random.split(key, 4)
    gamma = jax.random.uniform(k1, (c,), jnp.float32, 0.8, 1.2)
    beta = jax.random.normal(k2, (c,), jnp.float32) * 0.1
    mean = jax.random.normal(k3, (c,), jnp.float32) * 0.1
    var = jax.random.uniform(k4, (c,), jnp.float32, 0.5, 1.5)
    return gamma / jnp.sqrt(var + eps), beta, mean


def init_tcn_params(key, in_channels, num_filters, kernel_sizes, dilations):
    """Returns (kernel_params, reference_params)."""
    keys = jax.random.split(key, 1 + len(num_filters))
    cin = in_channels
    cin_p0 = _round_up(cin, LANE)

    s0, b0, m0 = _bn_affine(keys[0], cin)
    bn0_scale = s0.reshape(1, cin)
    bn0_shift = (b0 - s0 * m0).reshape(1, cin)

    kparams = {"cin_p": cin_p0, "layers": []}
    ref = {"bn0_scale": bn0_scale, "bn0_shift": bn0_shift, "layers": []}

    for i, cout in enumerate(num_filters):
        K = kernel_sizes[i]
        d = dilations[i]
        lk = jax.random.split(keys[1 + i], 6)
        cin_p = _round_up(cin, LANE)
        cout_p = _round_up(cout, LANE)

        # weight_norm(Conv1d): w = g * v / ||v||  (norm over (in, k) per out-ch)
        v = jax.random.normal(lk[0], (cout, cin, K), jnp.float32) * 0.3
        g = jax.random.uniform(lk[1], (cout,), jnp.float32, 0.5, 1.5)
        vnorm = jnp.sqrt(jnp.sum(v * v, axis=(1, 2), keepdims=True)) + 1e-12
        weight = g[:, None, None] * v / vnorm                # (Cout, Cin, K)
        bias = jax.random.normal(lk[2], (cout,), jnp.float32) * 0.1

        # BatchNorm1d(cout): fold the multiplicative part into the conv weight,
        # keep the additive part (with conv bias) as a per-channel shift.
        sc, beta, mean = _bn_affine(lk[3], cout)
        shift = sc * (bias - mean) + beta                    # (Cout,)
        w_eff = weight * sc[:, None, None]                   # (Cout, Cin, K)
        w_kcio = jnp.transpose(w_eff, (2, 1, 0)).astype(jnp.bfloat16)  # (K,Cin,Cout)

        project = cin != cout
        if project:  # Res-connect 1x1 conv
            wres = jax.random.normal(lk[4], (cout, cin), jnp.float32)
            wres = (wres / jnp.sqrt(cin)).T                  # (Cin, Cout)
            bres = (jax.random.normal(lk[5], (cout,), jnp.float32) * 0.1
                    ).reshape(1, cout)
            wres_bf16 = wres.astype(jnp.bfloat16)

        # ----- lane-dense padded kernel-layout params -----
        w_pad = (jnp.zeros((K, cin_p, cout_p), jnp.bfloat16)
                 .at[:, :cin, :cout].set(w_kcio)
                 .reshape(K * cin_p, cout_p))
        shift_pad = jnp.zeros((1, cout_p), jnp.float32).at[0, :cout].set(shift)
        layer = {"K": K, "dilation": d, "project": project,
                 "w": w_pad, "shift": shift_pad}
        if project:
            layer["wres"] = (jnp.zeros((cin_p, cout_p), jnp.bfloat16)
                             .at[:cin, :cout].set(wres_bf16))
            layer["bres"] = (jnp.zeros((1, cout_p), jnp.float32)
                             .at[0, :cout].set(bres[0]))
        if i == 0:
            # BN0 fused into layer 0's prologue.  Padded lanes get scale=shift=0
            # so padded channels (and the causal zero halo) stay exactly zero.
            layer["in_scale"] = (jnp.zeros((1, cin_p), jnp.float32)
                                 .at[0, :cin].set(bn0_scale[0]))
            layer["in_shift"] = (jnp.zeros((1, cin_p), jnp.float32)
                                 .at[0, :cin].set(bn0_shift[0]))
        kparams["layers"].append(layer)

        ref_layer = {"K": K, "dilation": d, "project": project,
                     "w": w_kcio, "shift": shift.reshape(1, cout)}
        if project:
            ref_layer["wres"] = wres_bf16
            ref_layer["bres"] = bres
        ref["layers"].append(ref_layer)

        cin = cout

    kparams["cout_real"] = cin
    return kparams, ref


# ----------------------------------------------------------------------------
# Forward passes
# ----------------------------------------------------------------------------
def tcn_forward(x, kparams, reverse=False):
    # x: (B, 1, C_in, L) as fed to the PyTorch module.
    x = x[:, 0]                              # squeeze(1) -> (B, C_in, L)
    if reverse:
        x = x[:, :, ::-1]                    # torch.flip(dims=[2])
    x = jnp.transpose(x, (0, 2, 1))          # -> (B, L, C_in)  kernel layout
    B, L, cin = x.shape
    cin_p = kparams["cin_p"]
    h = (jnp.zeros((B, L, cin_p), jnp.bfloat16)
         .at[:, :, :cin].set(x.astype(jnp.bfloat16)))
    layers = kparams["layers"]
    for i, layer in enumerate(layers):
        h = conv_block(h, layer, fuse_pool=(i == len(layers) - 1))
    return h[:, 0, :kparams["cout_real"]]    # (B, C_last) f32


def tcn_reference(x, ref, reverse=False):
    """Pure-JAX reference mirroring the kernel's bf16 rounding points."""
    f32 = jnp.float32
    x = x[:, 0]
    if reverse:
        x = x[:, :, ::-1]
    h = jnp.transpose(x, (0, 2, 1)).astype(jnp.bfloat16).astype(f32)
    h = h * ref["bn0_scale"] + ref["bn0_shift"]
    h = h.astype(jnp.bfloat16).astype(f32)
    n = len(ref["layers"])
    for i, layer in enumerate(ref["layers"]):
        K, d = layer["K"], layer["dilation"]
        w = layer["w"].astype(f32)                       # (K, Cin, Cout)
        pad = (K - 1) * d
        B, L, _ = h.shape
        hp = jnp.pad(h, ((0, 0), (pad, 0), (0, 0)))
        acc = jnp.zeros((B, L, w.shape[2]), f32)
        for k in range(K):
            acc = acc + jnp.einsum("blc,cd->bld", hp[:, k * d:k * d + L, :], w[k])
        out = jnp.maximum(acc + layer["shift"], 0.0)
        if layer["project"]:
            res = jnp.einsum("blc,cd->bld", h,
                             layer["wres"].astype(f32)) + layer["bres"]
        else:
            res = h
        y = out + res
        h = y if i == n - 1 else y.astype(jnp.bfloat16).astype(f32)
    return jnp.mean(h, axis=1)


# ----------------------------------------------------------------------------
if __name__ == "__main__":
    B, C_in, L = 2, 4, 16
    num_filters = [4, 8]          # layer0: identity residual, layer1: 1x1 proj
    kernel_sizes = [3, 3]
    dilations = [1, 2]
    reverse = False

    key = jax.random.PRNGKey(0)
    kx, kp = jax.random.split(key)
    x = jax.random.normal(kx, (B, 1, C_in, L), jnp.float32)
    kparams, ref_params = init_tcn_params(kp, C_in, num_filters,
                                          kernel_sizes, dilations)

    fwd = jax.jit(lambda inp: tcn_forward(inp, kparams, reverse=reverse))
    out = jax.block_until_ready(fwd(x))
    ref = jax.block_until_ready(tcn_reference(x, ref_params, reverse=reverse))

    assert out.shape == (B, num_filters[-1]), out.shape
    assert jnp.allclose(out, ref, atol=2e-2, rtol=2e-2), (out, ref)
    print("KERNEL_OK")
</pallas_src>

<mosaic_0001>
module attributes {stable_mosaic.version = 11 : i64} {
  func.func @kernel(%arg0: i32, %arg1: i32, %arg2: memref<1x16x128xbf16, #tpu.memory_space<vmem>>, %arg3: memref<1x128xf32, #tpu.memory_space<vmem>>, %arg4: memref<1x128xf32, #tpu.memory_space<vmem>>, %arg5: memref<384x128xbf16, #tpu.memory_space<vmem>>, %arg6: memref<1x128xf32, #tpu.memory_space<vmem>>, %arg7: memref<1x16x128xbf16, #tpu.memory_space<vmem>>, %arg8: memref<32x128xbf16, #tpu.memory_space<vmem>>) attributes {dimension_semantics = [#tpu.dimension_semantics<parallel>, #tpu.dimension_semantics<parallel>], iteration_bounds = array<i64: 2, 1>, scalar_prefetch = 0 : i64, scratch_operands = 1 : i64, tpu.core_type = #tpu.core_type<tc>, window_params = [{transform_indices = @transform_0, window_bounds = array<i64: 1, 16, 128>}, {pipeline_mode = #tpu.pipeline_mode<synchronous>, transform_indices = @transform_1, window_bounds = array<i64: 1, 128>}, {pipeline_mode = #tpu.pipeline_mode<synchronous>, transform_indices = @transform_2, window_bounds = array<i64: 1, 128>}, {pipeline_mode = #tpu.pipeline_mode<synchronous>, transform_indices = @transform_3, window_bounds = array<i64: 384, 128>}, {pipeline_mode = #tpu.pipeline_mode<synchronous>, transform_indices = @transform_4, window_bounds = array<i64: 1, 128>}, {transform_indices = @transform_5, window_bounds = array<i64: 1, 16, 128>}]} {
    %c0_i32 = arith.constant 0 : i32
    %0 = arith.cmpi eq, %arg1, %c0_i32 : i32
    %1 = arith.extui %0 : i1 to i32
    %c0_i32_0 = arith.constant 0 : i32
    %2 = arith.cmpi ne, %1, %c0_i32_0 : i32
    scf.if %2 {
      %c0_14 = arith.constant 0 : index
      %c0_15 = arith.constant 0 : index
      %c0_16 = arith.constant 0 : index
      %21 = vector.load %arg2[%c0_14, %c0_15, %c0_16] : memref<1x16x128xbf16, #tpu.memory_space<vmem>>, vector<1x16x128xbf16>
      %22 = vector.shape_cast %21 : vector<1x16x128xbf16> to vector<16x128xbf16>
      %23 = arith.extf %22 : vector<16x128xbf16> to vector<16x128xf32>
      %c0_17 = arith.constant 0 : index
      %c0_18 = arith.constant 0 : index
      %24 = vector.load %arg3[%c0_17, %c0_18] : memref<1x128xf32, #tpu.memory_space<vmem>>, vector<1x128xf32>
      %25 = vector.broadcast %24 : vector<1x128xf32> to vector<16x128xf32>
      %26 = arith.mulf %23, %25 : vector<16x128xf32>
      %c0_19 = arith.constant 0 : index
      %c0_20 = arith.constant 0 : index
      %27 = vector.load %arg4[%c0_19, %c0_20] : memref<1x128xf32, #tpu.memory_space<vmem>>, vector<1x128xf32>
      %28 = vector.broadcast %27 : vector<1x128xf32> to vector<16x128xf32>
      %29 = arith.addf %26, %28 : vector<16x128xf32>
      %30 = arith.truncf %29 : vector<16x128xf32> to vector<16x128xbf16>
      %cst_21 = arith.constant 0.000000e+00 : bf16
      %31 = vector.broadcast %cst_21 : bf16 to vector<2x128xbf16>
      %32 = tpu.concatenate %31, %30 in 0 : vector<2x128xbf16>, vector<16x128xbf16> -> vector<18x128xbf16>
      %c0_22 = arith.constant 0 : index
      %c0_23 = arith.constant 0 : index
      %33 = vector.load %arg8[%c0_22, %c0_23] : memref<32x128xbf16, #tpu.memory_space<vmem>>, vector<18x128xbf16>
      tpu.vector_store %arg8[%c0_22, %c0_23], %32 {strides = array<i32>} : memref<32x128xbf16, #tpu.memory_space<vmem>>, vector<18x128xbf16>,
    } else {
    }
    %c0 = arith.constant 0 : index
    %c0_1 = arith.constant 0 : index
    %3 = vector.load %arg8[%c0, %c0_1] : memref<32x128xbf16, #tpu.memory_space<vmem>>, vector<16x128xbf16>
    %c1 = arith.constant 1 : index
    %c0_2 = arith.constant 0 : index
    %4 = vector.load %arg8[%c1, %c0_2] : memref<32x128xbf16, #tpu.memory_space<vmem>>, vector<16x128xbf16>
    %c2 = arith.constant 2 : index
    %c0_3 = arith.constant 0 : index
    %5 = vector.load %arg8[%c2, %c0_3] : memref<32x128xbf16, #tpu.memory_space<vmem>>, vector<16x128xbf16>
    %6 = tpu.concatenate %3, %4, %5 in 1 : vector<16x128xbf16>, vector<16x128xbf16>, vector<16x128xbf16> -> vector<16x384xbf16>
    %c0_4 = arith.constant 0 : index
    %c0_5 = arith.constant 0 : index
    %7 = vector.load %arg5[%c0_4, %c0_5] : memref<384x128xbf16, #tpu.memory_space<vmem>>, vector<384x128xbf16>
    %cst = arith.constant dense<0.000000e+00> : vector<16x128xf32>
    %8 = tpu.matmul %6, %7, %cst {dimension_numbers = #tpu.dot_dimension_numbers<[1], [0], [0], [1], [0, 0, 1, 1], [], []>} : vector<16x384xbf16>, vector<384x128xbf16>, vector<16x128xf32> -> vector<16x128xf32>
    %c0_6 = arith.constant 0 : index
    %c0_7 = arith.constant 0 : index
    %9 = vector.load %arg6[%c0_6, %c0_7] : memref<1x128xf32, #tpu.memory_space<vmem>>, vector<1x128xf32>
    %10 = vector.broadcast %9 : vector<1x128xf32> to vector<16x128xf32>
    %11 = arith.addf %8, %10 : vector<16x128xf32>
    %cst_8 = arith.constant 0.000000e+00 : f32
    %12 = vector.broadcast %cst_8 : f32 to vector<16x128xf32>
    %13 = arith.maximumf %11, %12 : vector<16x128xf32>
    %c2_9 = arith.constant 2 : index
    %c0_10 = arith.constant 0 : index
    %14 = vector.load %arg8[%c2_9, %c0_10] : memref<32x128xbf16, #tpu.memory_space<vmem>>, vector<16x128xbf16>
    %15 = arith.extf %14 : vector<16x128xbf16> to vector<16x128xf32>
    %16 = arith.addf %13, %15 : vector<16x128xf32>
    %17 = arith.truncf %16 : vector<16x128xf32> to vector<16x128xbf16>
    %c0_11 = arith.constant 0 : index
    %c0_12 = arith.constant 0 : index
    %c0_13 = arith.constant 0 : index
    %18 = vector.load %arg7[%c0_11, %c0_12, %c0_13] : memref<1x16x128xbf16, #tpu.memory_space<vmem>>, vector<1x16x128xbf16>
    %19 = vector.shape_cast %18 : vector<1x16x128xbf16> to vector<16x128xbf16>
    %20 = vector.shape_cast %17 : vector<16x128xbf16> to vector<1x16x128xbf16>
    tpu.vector_store %arg7[%c0_11, %c0_12, %c0_13], %20 {strides = array<i32>} : memref<1x16x128xbf16, #tpu.memory_space<vmem>>, vector<1x16x128xbf16>,
    return
  }
  func.func @transform_0(%arg0: i32, %arg1: i32) -> (i32, i32, i32) {
    %c0_i32 = arith.constant 0 : i32
    %c0_i32_0 = arith.constant 0 : i32
    %c0_i32_1 = arith.constant 0 : i32
    return %arg0, %c0_i32, %c0_i32_0 : i32, i32, i32
  }
  func.func @transform_1(%arg0: i32, %arg1: i32) -> (i32, i32) {
    %c0_i32 = arith.constant 0 : i32
    %c0_i32_0 = arith.constant 0 : i32
    %c0_i32_1 = arith.constant 0 : i32
    return %c0_i32, %c0_i32_0 : i32, i32
  }
  func.func @transform_2(%arg0: i32, %arg1: i32) -> (i32, i32) {
    %c0_i32 = arith.constant 0 : i32
    %c0_i32_0 = arith.constant 0 : i32
    %c0_i32_1 = arith.constant 0 : i32
    return %c0_i32, %c0_i32_0 : i32, i32
  }
  func.func @transform_3(%arg0: i32, %arg1: i32) -> (i32, i32) {
    %c0_i32 = arith.constant 0 : i32
    %c0_i32_0 = arith.constant 0 : i32
    %c0_i32_1 = arith.constant 0 : i32
    return %c0_i32, %c0_i32_0 : i32, i32
  }
  func.func @transform_4(%arg0: i32, %arg1: i32) -> (i32, i32) {
    %c0_i32 = arith.constant 0 : i32
    %c0_i32_0 = arith.constant 0 : i32
    %c0_i32_1 = arith.constant 0 : i32
    return %c0_i32, %c0_i32_0 : i32, i32
  }
  func.func @transform_5(%arg0: i32, %arg1: i32) -> (i32, i32, i32) {
    %c0_i32 = arith.constant 0 : i32
    %c0_i32_0 = arith.constant 0 : i32
    return %arg0, %arg1, %c0_i32 : i32, i32, i32
  }
}

module attributes {stable_mosaic.version = 11 : i64} {
  func.func @kernel(%arg0: i32, %arg1: i32, %arg2: memref<1x16x128xbf16, #tpu.memory_space<vmem>>, %arg3: memref<384x128xbf16, #tpu.memory_space<vmem>>, %arg4: memref<1x128xf32, #tpu.memory_space<vmem>>, %arg5: memref<128x128xbf16, #tpu.memory_space<vmem>>, %arg6: memref<1x128xf32, #tpu.memory_space<vmem>>, %arg7: memref<1x1x128xf32, #tpu.memory_space<vmem>>, %arg8: memref<32x128xbf16, #tpu.memory_space<vmem>>, %arg9: memref<1x128xf32, #tpu.memory_space<vmem>>) attributes {dimension_semantics = [#tpu.dimension_semantics<parallel>, #tpu.dimension_semantics<arbitrary>], iteration_bounds = array<i64: 2, 1>, scalar_prefetch = 0 : i64, scratch_operands = 2 : i64, tpu.core_type = #tpu.core_type<tc>, window_params = [{transform_indices = @transform_0, window_bounds = array<i64: 1, 16, 128>}, {pipeline_mode = #tpu.pipeline_mode<synchronous>, transform_indices = @transform_1, window_bounds = array<i64: 384, 128>}, {pipeline_mode = #tpu.pipeline_mode<synchronous>, transform_indices = @transform_2, window_bounds = array<i64: 1, 128>}, {pipeline_mode = #tpu.pipeline_mode<synchronous>, transform_indices = @transform_3, window_bounds = array<i64: 128, 128>}, {pipeline_mode = #tpu.pipeline_mode<synchronous>, transform_indices = @transform_4, window_bounds = array<i64: 1, 128>}, {transform_indices = @transform_5, window_bounds = array<i64: 1, 1, 128>}]} {
    %c0_i32 = arith.constant 0 : i32
    %0 = arith.cmpi eq, %arg1, %c0_i32 : i32
    %1 = arith.extui %0 : i1 to i32
    %c0_i32_0 = arith.constant 0 : i32
    %2 = arith.cmpi ne, %1, %c0_i32_0 : i32
    scf.if %2 {
      %c0_25 = arith.constant 0 : index
      %c0_26 = arith.constant 0 : index
      %c0_27 = arith.constant 0 : index
      %32 = vector.load %arg2[%c0_25, %c0_26, %c0_27] : memref<1x16x128xbf16, #tpu.memory_space<vmem>>, vector<1x16x128xbf16>
      %33 = vector.shape_cast %32 : vector<1x16x128xbf16> to vector<16x128xbf16>
      %cst_28 = arith.constant 0.000000e+00 : bf16
      %34 = vector.broadcast %cst_28 : bf16 to vector<4x128xbf16>
      %35 = tpu.concatenate %34, %33 in 0 : vector<4x128xbf16>, vector<16x128xbf16> -> vector<20x128xbf16>
      %c0_29 = arith.constant 0 : index
      %c0_30 = arith.constant 0 : index
      %36 = vector.load %arg8[%c0_29, %c0_30] : memref<32x128xbf16, #tpu.memory_space<vmem>>, vector<20x128xbf16>
      tpu.vector_store %arg8[%c0_29, %c0_30], %35 {strides = array<i32>} : memref<32x128xbf16, #tpu.memory_space<vmem>>, vector<20x128xbf16>,
    } else {
    }
    %c0 = arith.constant 0 : index
    %c0_1 = arith.constant 0 : index
    %3 = vector.load %arg8[%c0, %c0_1] : memref<32x128xbf16, #tpu.memory_space<vmem>>, vector<16x128xbf16>
    %c2 = arith.constant 2 : index
    %c0_2 = arith.constant 0 : index
    %4 = vector.load %arg8[%c2, %c0_2] : memref<32x128xbf16, #tpu.memory_space<vmem>>, vector<16x128xbf16>
    %c4 = arith.constant 4 : index
    %c0_3 = arith.constant 0 : index
    %5 = vector.load %arg8[%c4, %c0_3] : memref<32x128xbf16, #tpu.memory_space<vmem>>, vector<16x128xbf16>
    %6 = tpu.concatenate %3, %4, %5 in 1 : vector<16x128xbf16>, vector<16x128xbf16>, vector<16x128xbf16> -> vector<16x384xbf16>
    %c0_4 = arith.constant 0 : index
    %c0_5 = arith.constant 0 : index
    %7 = vector.load %arg3[%c0_4, %c0_5] : memref<384x128xbf16, #tpu.memory_space<vmem>>, vector<384x128xbf16>
    %cst = arith.constant dense<0.000000e+00> : vector<16x128xf32>
    %8 = tpu.matmul %6, %7, %cst {dimension_numbers = #tpu.dot_dimension_numbers<[1], [0], [0], [1], [0, 0, 1, 1], [], []>} : vector<16x384xbf16>, vector<384x128xbf16>, vector<16x128xf32> -> vector<16x128xf32>
    %c0_6 = arith.constant 0 : index
    %c0_7 = arith.constant 0 : index
    %9 = vector.load %arg4[%c0_6, %c0_7] : memref<1x128xf32, #tpu.memory_space<vmem>>, vector<1x128xf32>
    %10 = vector.broadcast %9 : vector<1x128xf32> to vector<16x128xf32>
    %11 = arith.addf %8, %10 : vector<16x128xf32>
    %cst_8 = arith.constant 0.000000e+00 : f32
    %12 = vector.broadcast %cst_8 : f32 to vector<16x128xf32>
    %13 = arith.maximumf %11, %12 : vector<16x128xf32>
    %c4_9 = arith.constant 4 : index
    %c0_10 = arith.constant 0 : index
    %14 = vector.load %arg8[%c4_9, %c0_10] : memref<32x128xbf16, #tpu.memory_space<vmem>>, vector<16x128xbf16>
    %c0_11 = arith.constant 0 : index
    %c0_12 = arith.constant 0 : index
    %15 = vector.load %arg5[%c0_11, %c0_12] : memref<128x128xbf16, #tpu.memory_space<vmem>>, vector<128x128xbf16>
    %cst_13 = arith.constant dense<0.000000e+00> : vector<16x128xf32>
    %16 = tpu.matmul %14, %15, %cst_13 {dimension_numbers = #tpu.dot_dimension_numbers<[1], [0], [0], [1], [0, 0, 1, 1], [], []>} : vector<16x128xbf16>, vector<128x128xbf16>, vector<16x128xf32> -> vector<16x128xf32>
    %c0_14 = arith.constant 0 : index
    %c0_15 = arith.constant 0 : index
    %17 = vector.load %arg6[%c0_14, %c0_15] : memref<1x128xf32, #tpu.memory_space<vmem>>, vector<1x128xf32>
    %18 = vector.broadcast %17 : vector<1x128xf32> to vector<16x128xf32>
    %19 = arith.addf %16, %18 : vector<16x128xf32>
    %20 = arith.addf %13, %19 : vector<16x128xf32>
    %c0_i32_16 = arith.constant 0 : i32
    %21 = arith.cmpi eq, %arg1, %c0_i32_16 : i32
    %22 = arith.extui %21 : i1 to i32
    %c0_i32_17 = arith.constant 0 : i32
    %23 = arith.cmpi ne, %22, %c0_i32_17 : i32
    scf.if %23 {
      %cst_25 = arith.constant 0.000000e+00 : f32
      %32 = vector.broadcast %cst_25 : f32 to vector<1x128xf32>
      %c0_26 = arith.constant 0 : index
      %c0_27 = arith.constant 0 : index
      %33 = vector.load %arg9[%c0_26, %c0_27] : memref<1x128xf32, #tpu.memory_space<vmem>>, vector<1x128xf32>
      tpu.vector_store %arg9[%c0_26, %c0_27], %32 {strides = array<i32>} : memref<1x128xf32, #tpu.memory_space<vmem>>, vector<1x128xf32>,
    } else {
    }
    %c0_18 = arith.constant 0 : index
    %c0_19 = arith.constant 0 : index
    %24 = vector.load %arg9[%c0_18, %c0_19] : memref<1x128xf32, #tpu.memory_space<vmem>>, vector<1x128xf32>
    %cst_20 = arith.constant dense<0.000000e+00> : vector<128xf32>
    %25 = vector.multi_reduction <add>, %20, %cst_20 [0] : vector<16x128xf32> to vector<128xf32>
    %26 = vector.shape_cast %25 : vector<128xf32> to vector<1x128xf32>
    %27 = arith.addf %24, %26 : vector<1x128xf32>
    %c0_21 = arith.constant 0 : index
    %c0_22 = arith.constant 0 : index
    %28 = vector.load %arg9[%c0_21, %c0_22] : memref<1x128xf32, #tpu.memory_space<vmem>>, vector<1x128xf32>
    tpu.vector_store %arg9[%c0_21, %c0_22], %27 {strides = array<i32>} : memref<1x128xf32, #tpu.memory_space<vmem>>, vector<1x128xf32>,
    %c0_i32_23 = arith.constant 0 : i32
    %29 = arith.cmpi eq, %arg1, %c0_i32_23 : i32
    %30 = arith.extui %29 : i1 to i32
    %c0_i32_24 = arith.constant 0 : i32
    %31 = arith.cmpi ne, %30, %c0_i32_24 : i32
    scf.if %31 {
      %c0_25 = arith.constant 0 : index
      %c0_26 = arith.constant 0 : index
      %32 = vector.load %arg9[%c0_25, %c0_26] : memref<1x128xf32, #tpu.memory_space<vmem>>, vector<1x128xf32>
      %cst_27 = arith.constant 6.250000e-02 : f32
      %33 = vector.broadcast %cst_27 : f32 to vector<1x128xf32>
      %34 = arith.mulf %32, %33 : vector<1x128xf32>
      %c0_28 = arith.constant 0 : index
      %c0_29 = arith.constant 0 : index
      %c0_30 = arith.constant 0 : index
      %35 = vector.load %arg7[%c0_28, %c0_29, %c0_30] : memref<1x1x128xf32, #tpu.memory_space<vmem>>, vector<1x1x128xf32>
      %36 = vector.shape_cast %35 : vector<1x1x128xf32> to vector<1x128xf32>
      %37 = vector.shape_cast %34 : vector<1x128xf32> to vector<1x1x128xf32>
      tpu.vector_store %arg7[%c0_28, %c0_29, %c0_30], %37 {strides = array<i32>} : memref<1x1x128xf32, #tpu.memory_space<vmem>>, vector<1x1x128xf32>,
    } else {
    }
    return
  }
  func.func @transform_0(%arg0: i32, %arg1: i32) -> (i32, i32, i32) {
    %c0_i32 = arith.constant 0 : i32
    %c0_i32_0 = arith.constant 0 : i32
    %c0_i32_1 = arith.constant 0 : i32
    return %arg0, %c0_i32, %c0_i32_0 : i32, i32, i32
  }
  func.func @transform_1(%arg0: i32, %arg1: i32) -> (i32, i32) {
    %c0_i32 = arith.constant 0 : i32
    %c0_i32_0 = arith.constant 0 : i32
    %c0_i32_1 = arith.constant 0 : i32
    return %c0_i32, %c0_i32_0 : i32, i32
  }
  func.func @transform_2(%arg0: i32, %arg1: i32) -> (i32, i32) {
    %c0_i32 = arith.constant 0 : i32
    %c0_i32_0 = arith.constant 0 : i32
    %c0_i32_1 = arith.constant 0 : i32
    return %c0_i32, %c0_i32_0 : i32, i32
  }
  func.func @transform_3(%arg0: i32, %arg1: i32) -> (i32, i32) {
    %c0_i32 = arith.constant 0 : i32
    %c0_i32_0 = arith.constant 0 : i32
    %c0_i32_1 = arith.constant 0 : i32
    return %c0_i32, %c0_i32_0 : i32, i32
  }
  func.func @transform_4(%arg0: i32, %arg1: i32) -> (i32, i32) {
    %c0_i32 = arith.constant 0 : i32
    %c0_i32_0 = arith.constant 0 : i32
    %c0_i32_1 = arith.constant 0 : i32
    return %c0_i32, %c0_i32_0 : i32, i32
  }
  func.func @transform_5(%arg0: i32, %arg1: i32) -> (i32, i32, i32) {
    %c0_i32 = arith.constant 0 : i32
    %c0_i32_0 = arith.constant 0 : i32
    %c0_i32_1 = arith.constant 0 : i32
    return %arg0, %c0_i32, %c0_i32_0 : i32, i32, i32
  }
}

</mosaic_0001>

<llo_original>
// kernel: _lambda_.2
$region0: #{_lambda_.2}
  #allocation0 [shape = 'u32[]', space=smem, size = 0x4, offset = 0x4, fixed_abs, tag = 'smem constant byte address 0x4 - core index']
  #allocation1 [shape = 'u32[144,128]{1,0:T(1,128)}', space=vmem, size = 0x12000, scoped, tag = 'internal scratch']
  #allocation2 [shape = 'bf16[32,128]{1,0:T(8,128)(2,1)}', space=vmem, size = 0x2000, scoped, tag = 'scratch operand']
  %s0 = inlined_call_operand.vmem [shape: bf16[2,16,128], index: 0, kind: input, shape index: {}]
  %s1 = inlined_call_operand.vmem [shape: f32[1,128], index: 1, kind: input, shape index: {}]
  %s2 = inlined_call_operand.vmem [shape: f32[1,128], index: 2, kind: input, shape index: {}]
  %s3 = inlined_call_operand.hbm [shape: bf16[384,128], index: 3, kind: input, shape index: {}]
  %s4 = inlined_call_operand.vmem [shape: f32[1,128], index: 4, kind: input, shape index: {}]
  %s5 = inlined_call_operand.vmem [shape: bf16[2,16,128], index: 5, kind: output, shape index: {}]
  %s6 = sld [smem:[#allocation0]]
  $region61: #{_lambda_.2} parent=0
    _
  %s8 = ssub.s32 1, %s6
  %s9 = scalar_select 0, %s8, %s6
  $region1: #{_lambda_.2} parent=0
    #allocation3 [shape = 'u8[98304]{0}', space=vmem, size = 0x18000, scoped, tag = 'input window, operand 3, single buffered']
    #allocation4 [shape = 's32[2]{0}', space=sflag, size = 0x8, scoped, tag = 'scoped memory for _lambda_.2']
    %10 = vsyncpa [#allocation4], 0
    loop: start=0, step=1, limit=4
    $region2: #{_lambda_.2} parent=1 // loop_pre_header
      _
    $region3: #{_lambda_.2} parent=1 // loop_header
      %s12 = sphi 0, %s16
      %p13 = scmp.ge.s32.totalorder %s12, 4
      %s19 = sphi 0, %s31
      %s20 = sphi 0, %s27
      %s21 = sphi 0, %s19
      %s22 = sphi 0, %s20
      %s23 = sphi 0, %s21
      %s24 = sphi 0, %s22
      %s34 = sphi 0, %s36
      %s37 = sphi 0, %s34
      %s38 = sphi 0, %s37
      %s54 = sphi 0, %s38
      %s58 = sphi 0, %s58
      %s60 = sphi 0, %s58
      %s61 = sphi 0, %s60
      %s75 = sphi 0, %s61
      %s79 = sphi 0, %s79
      %s81 = sphi 0, %s79
      %s82 = sphi 0, %s81
      %s96 = sphi 0, %s82
      %s100 = sphi 0, %s100
      %s102 = sphi 0, %s100
      %s103 = sphi 0, %s102
      %s117 = sphi 0, %s103
      %s121 = sphi 0, %s121
      %s123 = sphi 0, %s121
      %s124 = sphi 0, %s123
      %s138 = sphi 0, %s124
      %s146 = sphi 0, %s148
      %s149 = sphi 0, %s146
      %s150 = sphi 0, %s149
      %s166 = sphi 0, %s150
    $region4: #{_lambda_.2} parent=1 // loop_header_branch
      %15 = sbr.rel (%p13) target = $region8
    $region5: #{_lambda_.2} parent=1 // loop_body
      %s17 = ssub.s32 %s12, 1
      %s18 = ssub.s32 %s12, 2
      %s25 = sadd.s32 1, %s20
      %p26 = scmp.ge.s32.totalorder %s25, 1
      %s27 = scalar_select %p26, 0, %s25
      %s28 = sadd.s32 1, %s19
      %s29 = scalar_select %p26, %s28, %s19
      %p30 = scmp.ge.s32.totalorder %s29, 2
      %s31 = scalar_select %p30, 0, %s29
      %s32 = ssub.s32 %s19, %s31
      %p33 = scmp.eq.s32.totalorder %s32, 0
      %s35 = sadd.s32 %s34, 1
      %s36 = scalar_select %p33, %s34, %s35
      %p39 = pneg %p33
      %p40 = scmp.eq.s32.totalorder %s12, 1
      %p41 = por %p39, %p40
      %p42 = scmp.ne.s32.totalorder %s34, %s37
      %p43 = scmp.eq.s32.totalorder %s12, 0
      %p44 = por %p42, %p43
      %p45 = scmp.ne.s32.totalorder %s34, %s37
      %p46 = scmp.eq.s32.totalorder %s17, 1
      %p47 = por %p45, %p46
      %p48 = scmp.ne.s32.totalorder %s37, %s38
      %p49 = scmp.eq.s32.totalorder %s17, 0
      %p50 = por %p48, %p49
      %p51 = scmp.ne.s32.totalorder %s37, %s38
      %p52 = scmp.eq.s32.totalorder %s18, 1
      %p53 = por %p51, %p52
      %p55 = scmp.ne.s32.totalorder %s38, %s54
      %p56 = scmp.eq.s32.totalorder %s18, 0
      %p57 = por %p55, %p56
      %s59 = sadd.s32 %s58, 1
      %p62 = scmp.eq.s32.totalorder %s12, 1
      %p63 = scmp.ne.s32.totalorder %s58, %s60
      %p64 = scmp.eq.s32.totalorder %s12, 0
      %p65 = por %p63, %p64
      %p66 = scmp.ne.s32.totalorder %s58, %s60
      %p67 = scmp.eq.s32.totalorder %s17, 1
      %p68 = por %p66, %p67
      %p69 = scmp.ne.s32.totalorder %s60, %s61
      %p70 = scmp.eq.s32.totalorder %s17, 0
      %p71 = por %p69, %p70
      %p72 = scmp.ne.s32.totalorder %s60, %s61
      %p73 = scmp.eq.s32.totalorder %s18, 1
      %p74 = por %p72, %p73
      %p76 = scmp.ne.s32.totalorder %s61, %s75
      %p77 = scmp.eq.s32.totalorder %s18, 0
      %p78 = por %p76, %p77
      %s80 = sadd.s32 %s79, 1
      %p83 = scmp.eq.s32.totalorder %s12, 1
      %p84 = scmp.ne.s32.totalorder %s79, %s81
      %p85 = scmp.eq.s32.totalorder %s12, 0
      %p86 = por %p84, %p85
      %p87 = scmp.ne.s32.totalorder %s79, %s81
      %p88 = scmp.eq.s32.totalorder %s17, 1
      %p89 = por %p87, %p88
      %p90 = scmp.ne.s32.totalorder %s81, %s82
      %p91 = scmp.eq.s32.totalorder %s17, 0
      %p92 = por %p90, %p91
      %p93 = scmp.ne.s32.totalorder %s81, %s82
      %p94 = scmp.eq.s32.totalorder %s18, 1
      %p95 = por %p93, %p94
      %p97 = scmp.ne.s32.totalorder %s82, %s96
      %p98 = scmp.eq.s32.totalorder %s18, 0
      %p99 = por %p97, %p98
      %s101 = sadd.s32 %s100, 1
      %p104 = scmp.eq.s32.totalorder %s12, 1
      %p105 = scmp.ne.s32.totalorder %s100, %s102
      %p106 = scmp.eq.s32.totalorder %s12, 0
      %p107 = por %p105, %p106
      %p108 = scmp.ne.s32.totalorder %s100, %s102
      %p109 = scmp.eq.s32.totalorder %s17, 1
      %p110 = por %p108, %p109
      %p111 = scmp.ne.s32.totalorder %s102, %s103
      %p112 = scmp.eq.s32.totalorder %s17, 0
      %p113 = por %p111, %p112
      %p114 = scmp.ne.s32.totalorder %s102, %s103
      %p115 = scmp.eq.s32.totalorder %s18, 1
      %p116 = por %p114, %p115
      %p118 = scmp.ne.s32.totalorder %s103, %s117
      %p119 = scmp.eq.s32.totalorder %s18, 0
      %p120 = por %p118, %p119
      %s122 = sadd.s32 %s121, 1
      %p125 = scmp.eq.s32.totalorder %s12, 1
      %p126 = scmp.ne.s32.totalorder %s121, %s123
      %p127 = scmp.eq.s32.totalorder %s12, 0
      %p128 = por %p126, %p127
      %p129 = scmp.ne.s32.totalorder %s121, %s123
      %p130 = scmp.eq.s32.totalorder %s17, 1
      %p131 = por %p129, %p130
      %p132 = scmp.ne.s32.totalorder %s123, %s124
      %p133 = scmp.eq.s32.totalorder %s17, 0
      %p134 = por %p132, %p133
      %p135 = scmp.ne.s32.totalorder %s123, %s124
      %p136 = scmp.eq.s32.totalorder %s18, 1
      %p137 = por %p135, %p136
      %p139 = scmp.ne.s32.totalorder %s124, %s138
      %p140 = scmp.eq.s32.totalorder %s18, 0
      %p141 = por %p139, %p140
      %s142 = ssub.s32 %s19, %s31
      %s143 = ssub.s32 %s20, %s27
      %s144 = sor.u32 %s142, %s143
      %p145 = scmp.eq.s32.totalorder %s144, 0
      %s147 = sadd.s32 %s146, 1
      %s148 = scalar_select %p145, %s146, %s147
      %p151 = pneg %p145
      %p152 = scmp.eq.s32.totalorder %s12, 1
      %p153 = por %p151, %p152
      %p154 = scmp.ne.s32.totalorder %s146, %s149
      %p155 = scmp.eq.s32.totalorder %s12, 0
      %p156 = por %p154, %p155
      %p157 = scmp.ne.s32.totalorder %s146, %s149
      %p158 = scmp.eq.s32.totalorder %s17, 1
      %p159 = por %p157, %p158
      %p160 = scmp.ne.s32.totalorder %s149, %s150
      %p161 = scmp.eq.s32.totalorder %s17, 0
      %p162 = por %p160, %p161
      %p163 = scmp.ne.s32.totalorder %s149, %s150
      %p164 = scmp.eq.s32.totalorder %s18, 1
      %p165 = por %p163, %p164
      %p167 = scmp.ne.s32.totalorder %s150, %s166
      %p168 = scmp.eq.s32.totalorder %s18, 0
      %p169 = por %p167, %p168
      %p170 = scmp.le.s32.totalorder 1, %s12
      %p171 = scmp.lt.s32.totalorder %s12, 3
      %p172 = pnand %p170, %p171
      %p173 = pneg %p172
      // Predicated region
      $region9: #{_lambda_.2} parent=5 // pred_check
        _
      $region10: #{_lambda_.2} parent=5 // pred_check_branch
        %175 = sbr.rel (%p172) target = $region12
      $region11: #{_lambda_.2} parent=5 // pred_region
        %s176 = ssub.s32 %s12, 1
        // Predicated region
        $region13: #{_lambda_.2} parent=11 // pred_check
          %p177 = pneg %p71
        $region14: #{_lambda_.2} parent=11 // pred_check_branch
          %179 = sbr.rel (%p177) target = $region16
        $region15: #{_lambda_.2} parent=11 // pred_region
          _
        $region16: #{_lambda_.2} parent=11 // pred_fallthru
          _
        // Predicated region
        $region17: #{_lambda_.2} parent=11 // pred_check
          %p180 = pneg %p92
        $region18: #{_lambda_.2} parent=11 // pred_check_branch
          %182 = sbr.rel (%p180) target = $region20
        $region19: #{_lambda_.2} parent=11 // pred_region
          _
        $region20: #{_lambda_.2} parent=11 // pred_fallthru
          _
        // Predicated region
        $region21: #{_lambda_.2} parent=11 // pred_check
          %p183 = pneg %p113
        $region22: #{_lambda_.2} parent=11 // pred_check_branch
          %185 = sbr.rel (%p183) target = $region24
        $region23: #{_lambda_.2} parent=11 // pred_region
          %s187 = ssub.s32 3072, 3072
          %188 = vsyncadd [#allocation4], %s187
          %s189 = sshll.u32 [#allocation3], 4
          %s190 = int_to_ptr.vmem [resolvable:$true] %s189
          %195 = dma.hbm_to_vmem [thread:$0]  %s3, 3072, %s190, [#allocation4], 64, 64, 4
        $region24: #{_lambda_.2} parent=11 // pred_fallthru
          _
        // Predicated region
        $region25: #{_lambda_.2} parent=11 // pred_check
          %p196 = pneg %p134
        $region26: #{_lambda_.2} parent=11 // pred_check_branch
          %198 = sbr.rel (%p196) target = $region28
        $region27: #{_lambda_.2} parent=11 // pred_region
          _
        $region28: #{_lambda_.2} parent=11 // pred_fallthru
          _
      $region12: #{_lambda_.2} parent=5 // pred_fallthru
        _
      %p199 = scmp.lt.s32.totalorder %s12, 2
      // Predicated region
      $region29: #{_lambda_.2} parent=5 // pred_check
        %p200 = pneg %p199
      $region30: #{_lambda_.2} parent=5 // pred_check_branch
        %202 = sbr.rel (%p200) target = $region32
      $region31: #{_lambda_.2} parent=5 // pred_region
        // Predicated region
        $region33: #{_lambda_.2} parent=31 // pred_check
          %p203 = pneg %p44
        $region34: #{_lambda_.2} parent=31 // pred_check_branch
          %205 = sbr.rel (%p203) target = $region36
        $region35: #{_lambda_.2} parent=31 // pred_region
          %p206 = scmp.lt.s32.totalorder %s19, 1
          %s207 = scalar_select %p206, %s19, 1
          %s208 = smul.addr %s207, 2
          %s209 = smul.addr %s208, 4
          %s210 = scalar_lea.vmem %s0, %s209
        $region36: #{_lambda_.2} parent=31 // pred_fallthru
          _
      $region32: #{_lambda_.2} parent=5 // pred_fallthru
        _
      %p211 = scmp.le.s32.totalorder 1, %s12
      %p212 = scmp.lt.s32.totalorder %s12, 3
      %p213 = pnand %p211, %p212
      %p214 = pneg %p213
      // Predicated region
      $region37: #{_lambda_.2} parent=5 // pred_check
        _
      $region38: #{_lambda_.2} parent=5 // pred_check_branch
        %216 = sbr.rel (%p213) target = $region40
      $region39: #{_lambda_.2} parent=5 // pred_region
        %s217 = ssub.s32 %s12, 1
        // Predicated region
        $region41: #{_lambda_.2} parent=39 // pred_check
          %p218 = pneg %p113
        $region42: #{_lambda_.2} parent=39 // pred_check_branch
          %220 = sbr.rel (%p218) target = $region44
        $region43: #{_lambda_.2} parent=39 // pred_region
          %221 = dma.done [#allocation4], 3072
        $region44: #{_lambda_.2} parent=39 // pred_fallthru
          _
        %p222 = scmp.lt.s32.totalorder %s21, 1
        %s223 = scalar_select %p222, %s21, 1
        %s224 = smul.addr %s223, 2
        %s225 = smul.addr %s224, 4
        %s226 = scalar_lea.vmem %s0, %s225
        %p227 = pneg %p50
        %p228 = pneg %p47
        %p229 = pneg %p71
        %p230 = pneg %p68
        %p231 = pneg %p92
        %p232 = pneg %p89
        %p233 = pneg %p113
        %p234 = pneg %p110
        %p235 = pneg %p134
        %p236 = pneg %p131
        %p237 = pneg %p162
        %p238 = pneg %p159
        %s239 = smul.u32 2, %s22
        %p240 = scmp.lt.s32.totalorder %s21, 1
        %s241 = scalar_select %p240, %s21, 1
        %p242 = scmp.lt.s32.totalorder %s239, 1
        %s243 = scalar_select %p242, %s239, 1
        %s244 = smul.addr %s241, 2
        %s245 = sadd.s32 %s243, %s244
        %s246 = smul.addr %s245, 4
        %s247 = scalar_lea.vmem %s5, %s246
        %p248 = scmp.lt.s32.totalorder %s21, 1
        %s249 = scalar_select %p248, %s21, 1
        %s250 = smul.addr %s249, 2
        %s251 = smul.addr %s250, 4
        %s252 = scalar_lea.vmem %s0, %s251
        %s253 = smul.u32 2, %s22
        %p254 = scmp.lt.s32.totalorder %s21, 1
        %s255 = scalar_select %p254, %s21, 1
        %p256 = scmp.lt.s32.totalorder %s253, 1
        %s257 = scalar_select %p256, %s253, 1
        %s258 = smul.addr %s255, 2
        %s259 = sadd.s32 %s257, %s258
        %s260 = smul.addr %s259, 4
        %s261 = scalar_lea.vmem %s5, %s260
        %s262 = smul.u32 2, %s22
        %p264 = scmp.eq.s32.totalorder %s22, 0
        // Predicated region
        $region45: #{_lambda_.2} parent=39 // pred_check
          %p265 = pneg %p264
        $region46: #{_lambda_.2} parent=39 // pred_check_branch
          %267 = sbr.rel (%p265) target = $region48
        $region47: #{_lambda_.2} parent=39 // pred_region
          %v268 = vld [vmem:[%s252] sm:$0xf]
          %v269 = vld [vmem:[%s252 + $0x4] sm:$0xf]
          %v270 = vunpack.c.l.bf16 %v268
          %v271 = vunpack.c.l.bf16 %v269
          %v272 = vld [vmem:[%s1] sm:$0x1]
          %v274 = vlaneseq
          %v275 = vshrl.u32 %v274, 7
          %v276 = vsub.s32 0, %v275
          %v277 = vrot.slane %v272, %v276
          %v279 = vmul.f32 %v270, %v277
          %v280 = vmul.f32 %v271, %v277
          %v281 = vld [vmem:[%s2] sm:$0x1]
          %v283 = vlaneseq
          %v284 = vshrl.u32 %v283, 7
          %v285 = vsub.s32 0, %v284
          %v286 = vrot.slane %v281, %v285
          %v288 = vadd.f32 %v279, %v286
          %v289 = vadd.f32 %v280, %v286
          %v290 = vpack.c.bf16 %v289, %v288
          %v292 = vrot.slane %v290, 7
          %vm293 = vcmask 1040384
          %v296 = vsel %vm293, 0, %v292
          %v298 = vunpack.c.l.b16 %v296
          %v299 = vunpack.c.h.b16 %v296
          %v300 = vunpack.c.l.b16 %v292
          %v301 = vpack.c.b16 %v298, %v298
          %v302 = vpack.c.b16 %v299, %v299
          %v303 = vpack.c.b16 %v300, %v300
          %307 = vst [vmem:[#allocation2] sm:$0xf] %v301
          %308 = vst [vmem:[#allocation2 + $0x4] sm:$0xf] %v302
          %309 = vst [vmem:[#allocation2 + $0x8] sm:$0x1] %v303
        $region48: #{_lambda_.2} parent=39 // pred_fallthru
          _
        %v310 = vld [vmem:[#allocation2] sm:$0xf]
        %v311 = vld [vmem:[#allocation2 + $0x4] sm:$0xf]
        %v312 = vld [vmem:[#allocation2 + $0x8] sm:$0x1]
        %v313 = vld [vmem:[#allocation2] sm:$0xe]
        %v316 = vunpack.c.l.b16 %v310
        %v317 = vunpack.c.l.b16 %v311
        %v318 = vpack.c.b16 %v317, %v316
        %v321 = vunpack.c.l.b16 %v312
        %v322 = vpack.c.b16 %v321, %v321
        %vm323 = vsmask.f32 7424
        %v325 = vshrl.u32 %v318, 16
        %v327 = vshll.u32 %v318, 16
        %v329 = vrot.slane %v327, 1
        %v330 = vor.u32 %v325, %v329
        %v332 = vshll.u32 %v322, 16
        %v334 = vrot.slane %v332, 1
        %v335 = vsel %vm323, %v330, %v334
        %v338 = vunpack.c.l.b16 %v313
        %v339 = vpack.c.b16 %v317, %v338
        %vm340 = vcmask 1046528
        %v341 = vrot.slane %v339, 1
        %v342 = vrot.slane %v322, 1
        %v343 = vsel %vm340, %v341, %v342
        %v345 = vld [vmem:[#allocation3] sm:$0xf]
        %v346 = vld [vmem:[#allocation3 + $0x4] sm:$0xf]
        %v347 = vld [vmem:[#allocation3 + $0x8] sm:$0xf]
        %v348 = vld [vmem:[#allocation3 + $0xc] sm:$0xf]
        %v349 = vld [vmem:[#allocation3 + $0x10] sm:$0xf]
        %v350 = vld [vmem:[#allocation3 + $0x14] sm:$0xf]
        %v351 = vld [vmem:[#allocation3 + $0x18] sm:$0xf]
        %v352 = vld [vmem:[#allocation3 + $0x1c] sm:$0xf]
        %v353 = vld [vmem:[#allocation3 + $0x20] sm:$0xf]
        %v354 = vld [vmem:[#allocation3 + $0x24] sm:$0xf]
        %v355 = vld [vmem:[#allocation3 + $0x28] sm:$0xf]
        %v356 = vld [vmem:[#allocation3 + $0x2c] sm:$0xf]
        %v357 = vld [vmem:[#allocation3 + $0x30] sm:$0xf]
        %v358 = vld [vmem:[#allocation3 + $0x34] sm:$0xf]
        %v359 = vld [vmem:[#allocation3 + $0x38] sm:$0xf]
        %v360 = vld [vmem:[#allocation3 + $0x3c] sm:$0xf]
        %v361 = vld [vmem:[#allocation3 + $0x40] sm:$0xf]
        %v362 = vld [vmem:[#allocation3 + $0x44] sm:$0xf]
        %v363 = vld [vmem:[#allocation3 + $0x48] sm:$0xf]
        %v364 = vld [vmem:[#allocation3 + $0x4c] sm:$0xf]
        %v365 = vld [vmem:[#allocation3 + $0x50] sm:$0xf]
        %v366 = vld [vmem:[#allocation3 + $0x54] sm:$0xf]
        %v367 = vld [vmem:[#allocation3 + $0x58] sm:$0xf]
        %v368 = vld [vmem:[#allocation3 + $0x5c] sm:$0xf]
        %v369 = vld [vmem:[#allocation3 + $0x60] sm:$0xf]
        %v370 = vld [vmem:[#allocation3 + $0x64] sm:$0xf]
        %v371 = vld [vmem:[#allocation3 + $0x68] sm:$0xf]
        %v372 = vld [vmem:[#allocation3 + $0x6c] sm:$0xf]
        %v373 = vld [vmem:[#allocation3 + $0x70] sm:$0xf]
        %v374 = vld [vmem:[#allocation3 + $0x74] sm:$0xf]
        %v375 = vld [vmem:[#allocation3 + $0x78] sm:$0xf]
        %v376 = vld [vmem:[#allocation3 + $0x7c] sm:$0xf]
        %v377 = vld [vmem:[#allocation3 + $0x80] sm:$0xf]
        %v378 = vld [vmem:[#allocation3 + $0x84] sm:$0xf]
        %v379 = vld [vmem:[#allocation3 + $0x88] sm:$0xf]
        %v380 = vld [vmem:[#allocation3 + $0x8c] sm:$0xf]
        %v381 = vld [vmem:[#allocation3 + $0x90] sm:$0xf]
        %v382 = vld [vmem:[#allocation3 + $0x94] sm:$0xf]
        %v383 = vld [vmem:[#allocation3 + $0x98] sm:$0xf]
        %v384 = vld [vmem:[#allocation3 + $0x9c] sm:$0xf]
        %v385 = vld [vmem:[#allocation3 + $0xa0] sm:$0xf]
        %v386 = vld [vmem:[#allocation3 + $0xa4] sm:$0xf]
        %v387 = vld [vmem:[#allocation3 + $0xa8] sm:$0xf]
        %v388 = vld [vmem:[#allocation3 + $0xac] sm:$0xf]
        %v389 = vld [vmem:[#allocation3 + $0xb0] sm:$0xf]
        %v390 = vld [vmem:[#allocation3 + $0xb4] sm:$0xf]
        %v391 = vld [vmem:[#allocation3 + $0xb8] sm:$0xf]
        %v392 = vld [vmem:[#allocation3 + $0xbc] sm:$0xf]
        %v393 = vld [vmem:[%s4] sm:$0x1]
        %v395 = vlaneseq
        %v396 = vshrl.u32 %v395, 7
        %v397 = vsub.s32 0, %v396
        %v398 = vrot.slane %v393, %v397
        %v448 = vunpack.c.l.b16 %v345
        %v449 = vunpack.c.l.b16 %v346
        %v450 = vunpack.c.l.b16 %v347
        %v451 = vunpack.c.l.b16 %v348
        %v452 = vunpack.c.l.b16 %v349
        %v453 = vunpack.c.l.b16 %v350
        %v454 = vunpack.c.l.b16 %v351
        %v455 = vunpack.c.l.b16 %v352
        %v456 = vunpack.c.l.b16 %v353
        %v457 = vunpack.c.l.b16 %v354
        %v458 = vunpack.c.l.b16 %v355
        %v459 = vunpack.c.l.b16 %v356
        %v460 = vunpack.c.l.b16 %v357
        %v461 = vunpack.c.l.b16 %v358
        %v462 = vunpack.c.l.b16 %v359
        %v463 = vunpack.c.l.b16 %v360
        %v464 = vunpack.c.l.b16 %v361
        %v465 = vunpack.c.l.b16 %v362
        %v466 = vunpack.c.l.b16 %v363
        %v467 = vunpack.c.l.b16 %v364
        %v468 = vunpack.c.l.b16 %v365
        %v469 = vunpack.c.l.b16 %v366
        %v470 = vunpack.c.l.b16 %v367
        %v471 = vunpack.c.l.b16 %v368
        %v472 = vunpack.c.l.b16 %v369
        %v473 = vunpack.c.l.b16 %v370
        %v474 = vunpack.c.l.b16 %v371
        %v475 = vunpack.c.l.b16 %v372
        %v476 = vunpack.c.l.b16 %v373
        %v477 = vunpack.c.l.b16 %v374
        %v478 = vunpack.c.l.b16 %v375
        %v479 = vunpack.c.l.b16 %v376
        %v480 = vunpack.c.l.b16 %v377
        %v481 = vunpack.c.l.b16 %v378
        %v482 = vunpack.c.l.b16 %v379
        %v483 = vunpack.c.l.b16 %v380
        %v484 = vunpack.c.l.b16 %v381
        %v485 = vunpack.c.l.b16 %v382
        %v486 = vunpack.c.l.b16 %v383
        %v487 = vunpack.c.l.b16 %v384
        %v488 = vunpack.c.l.b16 %v385
        %v489 = vunpack.c.l.b16 %v386
        %v490 = vunpack.c.l.b16 %v387
        %v491 = vunpack.c.l.b16 %v388
        %v492 = vunpack.c.l.b16 %v389
        %v493 = vunpack.c.l.b16 %v390
        %v494 = vunpack.c.l.b16 %v391
        %v495 = vunpack.c.l.b16 %v392
        %v496 = vpack.c.b16 %v449, %v448
        %v497 = vpack.c.b16 %v451, %v450
        %v498 = vpack.c.b16 %v453, %v452
        %v499 = vpack.c.b16 %v455, %v454
        %v500 = vpack.c.b16 %v457, %v456
        %v501 = vpack.c.b16 %v459, %v458
        %v502 = vpack.c.b16 %v461, %v460
        %v503 = vpack.c.b16 %v463, %v462
        %v504 = vpack.c.b16 %v465, %v464
        %v505 = vpack.c.b16 %v467, %v466
        %v506 = vpack.c.b16 %v469, %v468
        %v507 = vpack.c.b16 %v471, %v470
        %v508 = vpack.c.b16 %v473, %v472
        %v509 = vpack.c.b16 %v475, %v474
        %v510 = vpack.c.b16 %v477, %v476
        %v511 = vpack.c.b16 %v479, %v478
        %v512 = vpack.c.b16 %v481, %v480
        %v513 = vpack.c.b16 %v483, %v482
        %v514 = vpack.c.b16 %v485, %v484
        %v515 = vpack.c.b16 %v487, %v486
        %v516 = vpack.c.b16 %v489, %v488
        %v517 = vpack.c.b16 %v491, %v490
        %v518 = vpack.c.b16 %v493, %v492
        %v519 = vpack.c.b16 %v495, %v494
        %544 = vmatprep.subr.bf16.mxu0 0
        %545 = vmatpush1.bf16.msra.mxu0 %v503
        %546 = vmatprep.subr.bf16.mxu0 0
        %547 = vmatpush1.bf16.msra.mxu0 %v502
        %548 = vmatprep.subr.bf16.mxu0 0
        %549 = vmatpush1.bf16.msra.mxu0 %v501
        %550 = vmatprep.subr.bf16.mxu0 0
        %551 = vmatpush1.bf16.msra.mxu0 %v500
        %552 = vmatprep.subr.bf16.mxu0 0
        %553 = vmatpush1.bf16.msra.mxu0 %v499
        %554 = vmatprep.subr.bf16.mxu0 0
        %555 = vmatpush1.bf16.msra.mxu0 %v498
        %556 = vmatprep.subr.bf16.mxu0 0
        %557 = vmatpush1.bf16.msra.mxu0 %v497
        %558 = vmatprep.subr.bf16.mxu0 0
        %559 = vmatpush1.bf16.msra.mxu0 %v496
        %560 = vmatprep.subr.bf16.mxu0 0
        %561 = vmatpush2.bf16.msra.mxu0 %v511
        %562 = vmatprep.subr.bf16.mxu0 0
        %563 = vmatpush2.bf16.msra.mxu0 %v510
        %564 = vmatprep.subr.bf16.mxu0 0
        %565 = vmatpush2.bf16.msra.mxu0 %v509
        %566 = vmatprep.subr.bf16.mxu0 0
        %567 = vmatpush2.bf16.msra.mxu0 %v508
        %568 = vmatprep.subr.bf16.mxu0 0
        %569 = vmatpush2.bf16.msra.mxu0 %v507
        %570 = vmatprep.subr.bf16.mxu0 0
        %571 = vmatpush2.bf16.msra.mxu0 %v506
        %572 = vmatprep.subr.bf16.mxu0 0
        %573 = vmatpush2.bf16.msra.mxu0 %v505
        %574 = vmatprep.subr.bf16.mxu0 0
        %575 = vmatpush2.bf16.msra.mxu0 %v504
        %576 = vmatprep.mubr.bf16.mxu0 %v335
        %577 = vmatmul.mubr.bf16.gmra.mxu0 %v318
        %v578 = vpop.f32.mrf.mxu0
        %v579 = vadd.f32 %v398, %v578
        %v580 = vpop.f32.mrf.mxu0
        %v581 = vpop.f32.mrf.mxu0
        %v582 = vadd.f32 %v398, %v581
        %v583 = vpop.f32.mrf.mxu0
        %584 = vdwg.mxu0
        %585 = vmatprep.subr.bf16.mxu0 0
        %586 = vmatpush1.bf16.msra.mxu0 %v519
        %587 = vmatprep.subr.bf16.mxu0 0
        %588 = vmatpush1.bf16.msra.mxu0 %v518
        %589 = vmatprep.subr.bf16.mxu0 0
        %590 = vmatpush1.bf16.msra.mxu0 %v517
        %591 = vmatprep.subr.bf16.mxu0 0
        %592 = vmatpush1.bf16.msra.mxu0 %v516
        %593 = vmatprep.subr.bf16.mxu0 0
        %594 = vmatpush1.bf16.msra.mxu0 %v515
        %595 = vmatprep.subr.bf16.mxu0 0
        %596 = vmatpush1.bf16.msra.mxu0 %v514
        %597 = vmatprep.subr.bf16.mxu0 0
        %598 = vmatpush1.bf16.msra.mxu0 %v513
        %599 = vmatprep.subr.bf16.mxu0 0
        %600 = vmatpush1.bf16.msra.mxu0 %v512
        %601 = vmatprep.subr.bf16.mxu0 0
        %602 = vmatpush2.bf16.msra.mxu0 0
        %603 = vmatprep.subr.bf16.mxu0 0
        %604 = vmatpush2.bf16.msra.mxu0 0
        %605 = vmatprep.subr.bf16.mxu0 0
        %606 = vmatpush2.bf16.msra.mxu0 0
        %607 = vmatprep.subr.bf16.mxu0 0
        %608 = vmatpush2.bf16.msra.mxu0 0
        %609 = vmatprep.subr.bf16.mxu0 0
        %610 = vmatpush2.bf16.msra.mxu0 0
        %611 = vmatprep.subr.bf16.mxu0 0
        %612 = vmatpush2.bf16.msra.mxu0 0
        %613 = vmatprep.subr.bf16.mxu0 0
        %614 = vmatpush2.bf16.msra.mxu0 0
        %615 = vmatprep.subr.bf16.mxu0 0
        %616 = vmatpush2.bf16.msra.mxu0 0
        %617 = vmatprep.mubr.bf16.mxu0 0
        %618 = vmatmul.mubr.bf16.gmra.mxu0 %v343
        %v619 = vpop.f32.mrf.mxu0
        %v620 = vadd.f32 %v579, %v619
        %v621 = vpop.f32.mrf.mxu0
        %v622 = vpop.f32.mrf.mxu0
        %v623 = vadd.f32 %v582, %v622
        %v624 = vpop.f32.mrf.mxu0
        %625 = vdwg.mxu0
        %v626 = vmax.f32 %v620, 0.0
        %v627 = vmax.f32 %v623, 0.0
        %v628 = vunpack.c.l.bf16 %v313
        %v629 = vunpack.c.l.bf16 %v311
        %v630 = vunpack.c.l.bf16 %v312
        %vm634 = vcmask 1045504
        %v635 = vrot.slane %v628, 2
        %v636 = vrot.slane %v629, 2
        %v637 = vsel %vm634, %v635, %v636
        %v638 = vrot.slane %v630, 2
        %v639 = vsel %vm634, %v636, %v638
        %v642 = vadd.f32 %v626, %v637
        %v643 = vadd.f32 %v627, %v639
        %v644 = vpack.c.bf16 %v643, %v642
        %v646 = vunpack.c.l.b16 %v644
        %v647 = vunpack.c.h.b16 %v644
        %v648 = vpack.c.b16 %v646, %v646
        %v649 = vpack.c.b16 %v647, %v647
        %652 = vst [vmem:[%s261] sm:$0xf] %v648
        %653 = vst [vmem:[%s261 + $0x4] sm:$0xf] %v649
        %s654 = smul.u32 2, %s22
        %p655 = scmp.lt.s32.totalorder %s21, 1
        %s656 = scalar_select %p655, %s21, 1
        %p657 = scmp.lt.s32.totalorder %s654, 1
        %s658 = scalar_select %p657, %s654, 1
        %s659 = smul.addr %s656, 2
        %s660 = sadd.s32 %s658, %s659
        %s661 = smul.addr %s660, 4
        %s662 = scalar_lea.vmem %s5, %s661
        // Predicated region
        $region49: #{_lambda_.2} parent=39 // pred_check
          %p663 = pneg %p159
        $region50: #{_lambda_.2} parent=39 // pred_check_branch
          %665 = sbr.rel (%p663) target = $region52
        $region51: #{_lambda_.2} parent=39 // pred_region
          %s666 = smul.u32 2, %s22
        $region52: #{_lambda_.2} parent=39 // pred_fallthru
          _
      $region40: #{_lambda_.2} parent=5 // pred_fallthru
        _
      %p667 = scmp.le.s32.totalorder 2, %s12
      // Predicated region
      $region53: #{_lambda_.2} parent=5 // pred_check
        %p668 = pneg %p667
      $region54: #{_lambda_.2} parent=5 // pred_check_branch
        %670 = sbr.rel (%p668) target = $region56
      $region55: #{_lambda_.2} parent=5 // pred_region
        %s671 = ssub.s32 %s12, 2
        // Predicated region
        $region57: #{_lambda_.2} parent=55 // pred_check
          %p672 = pneg %p165
        $region58: #{_lambda_.2} parent=55 // pred_check_branch
          %674 = sbr.rel (%p672) target = $region60
        $region59: #{_lambda_.2} parent=55 // pred_region
          %s675 = smul.u32 2, %s24
          %p676 = scmp.lt.s32.totalorder %s23, 1
          %s677 = scalar_select %p676, %s23, 1
          %p678 = scmp.lt.s32.totalorder %s675, 1
          %s679 = scalar_select %p678, %s675, 1
          %s680 = smul.addr %s677, 2
          %s681 = sadd.s32 %s679, %s680
          %s682 = smul.addr %s681, 4
          %s683 = scalar_lea.vmem %s5, %s682
        $region60: #{_lambda_.2} parent=55 // pred_fallthru
          _
      $region56: #{_lambda_.2} parent=5 // pred_fallthru
        _
    $region6: #{_lambda_.2} parent=1 // loop_footer
      %s16 = sadd.s32 1, %s12
    $region7: #{_lambda_.2} parent=1 // loop_footer_branch
      %11 = sbr.rel target = $region3
    $region8: #{_lambda_.2} parent=1 // loop_exit
      _
    %684 = vsyncpa [#allocation4], 1
    %s685 = scalar_lea.sflag [#allocation4], 1
    %686 = vsyncpa %s685, 1

// kernel: _lambda_.3
$region0: #{_lambda_.3}
  #allocation0 [shape = 'u32[]', space=smem, size = 0x4, offset = 0x4, fixed_abs, tag = 'smem constant byte address 0x4 - core index']
  #allocation1 [shape = 'u32[144,128]{1,0:T(1,128)}', space=vmem, size = 0x12000, scoped, tag = 'internal scratch']
  #allocation2 [shape = 'bf16[32,128]{1,0:T(8,128)(2,1)}', space=vmem, size = 0x2000, scoped, tag = 'scratch operand']
  #allocation3 [shape = 'f32[1,128]{1,0:T(1,128)}', space=vmem, size = 0x200, scoped, tag = 'scratch operand']
  %s0 = inlined_call_operand.vmem [shape: bf16[2,16,128], index: 0, kind: input, shape index: {}]
  %s1 = inlined_call_operand.vmem [shape: bf16[384,128], index: 1, kind: input, shape index: {}]
  %s2 = inlined_call_operand.vmem [shape: f32[1,128], index: 2, kind: input, shape index: {}]
  %s3 = inlined_call_operand.vmem [shape: bf16[128,128], index: 3, kind: input, shape index: {}]
  %s4 = inlined_call_operand.vmem [shape: f32[1,128], index: 4, kind: input, shape index: {}]
  %s5 = inlined_call_operand.hbm [shape: f32[2,1,128], index: 5, kind: output, shape index: {}]
  %s6 = sld [smem:[#allocation0]]
  $region65: #{_lambda_.3} parent=0
    _
  %s8 = ssub.s32 1, %s6
  %s9 = scalar_select 0, %s8, %s6
  $region1: #{_lambda_.3} parent=0
    #allocation4 [shape = 'u8[1024]{0}', space=vmem, size = 0x400, scoped, tag = 'output window, operand 0']
    #allocation5 [shape = 's32[2]{0}', space=sflag, size = 0x8, scoped, tag = 'scoped memory for _lambda_.3']
    %10 = vsyncpa [#allocation5], 0
    %s11 = scalar_lea.sflag [#allocation5], 1
    %12 = vsyncpa %s11, 0
    loop: start=0, step=1, limit=4
    $region2: #{_lambda_.3} parent=1 // loop_pre_header
      _
    $region3: #{_lambda_.3} parent=1 // loop_header
      %s14 = sphi 0, %s18
      %p15 = scmp.ge.s32.totalorder %s14, 4
      %s21 = sphi 0, %s33
      %s22 = sphi 0, %s29
      %s23 = sphi 0, %s21
      %s24 = sphi 0, %s22
      %s25 = sphi 0, %s23
      %s26 = sphi 0, %s24
      %s36 = sphi 0, %s38
      %s39 = sphi 0, %s36
      %s40 = sphi 0, %s39
      %s56 = sphi 0, %s40
      %s60 = sphi 0, %s60
      %s62 = sphi 0, %s60
      %s63 = sphi 0, %s62
      %s77 = sphi 0, %s63
      %s81 = sphi 0, %s81
      %s83 = sphi 0, %s81
      %s84 = sphi 0, %s83
      %s98 = sphi 0, %s84
      %s102 = sphi 0, %s102
      %s104 = sphi 0, %s102
      %s105 = sphi 0, %s104
      %s119 = sphi 0, %s105
      %s123 = sphi 0, %s123
      %s125 = sphi 0, %s123
      %s126 = sphi 0, %s125
      %s140 = sphi 0, %s126
      %s146 = sphi 0, %s148
      %s149 = sphi 0, %s146
      %s150 = sphi 0, %s149
      %s166 = sphi 0, %s150
    $region4: #{_lambda_.3} parent=1 // loop_header_branch
      %17 = sbr.rel (%p15) target = $region8
    $region5: #{_lambda_.3} parent=1 // loop_body
      %s19 = ssub.s32 %s14, 1
      %s20 = ssub.s32 %s14, 2
      %s27 = sadd.s32 1, %s22
      %p28 = scmp.ge.s32.totalorder %s27, 1
      %s29 = scalar_select %p28, 0, %s27
      %s30 = sadd.s32 1, %s21
      %s31 = scalar_select %p28, %s30, %s21
      %p32 = scmp.ge.s32.totalorder %s31, 2
      %s33 = scalar_select %p32, 0, %s31
      %s34 = ssub.s32 %s21, %s33
      %p35 = scmp.eq.s32.totalorder %s34, 0
      %s37 = sadd.s32 %s36, 1
      %s38 = scalar_select %p35, %s36, %s37
      %p41 = pneg %p35
      %p42 = scmp.eq.s32.totalorder %s14, 1
      %p43 = por %p41, %p42
      %p44 = scmp.ne.s32.totalorder %s36, %s39
      %p45 = scmp.eq.s32.totalorder %s14, 0
      %p46 = por %p44, %p45
      %p47 = scmp.ne.s32.totalorder %s36, %s39
      %p48 = scmp.eq.s32.totalorder %s19, 1
      %p49 = por %p47, %p48
      %p50 = scmp.ne.s32.totalorder %s39, %s40
      %p51 = scmp.eq.s32.totalorder %s19, 0
      %p52 = por %p50, %p51
      %p53 = scmp.ne.s32.totalorder %s39, %s40
      %p54 = scmp.eq.s32.totalorder %s20, 1
      %p55 = por %p53, %p54
      %p57 = scmp.ne.s32.totalorder %s40, %s56
      %p58 = scmp.eq.s32.totalorder %s20, 0
      %p59 = por %p57, %p58
      %s61 = sadd.s32 %s60, 1
      %p64 = scmp.eq.s32.totalorder %s14, 1
      %p65 = scmp.ne.s32.totalorder %s60, %s62
      %p66 = scmp.eq.s32.totalorder %s14, 0
      %p67 = por %p65, %p66
      %p68 = scmp.ne.s32.totalorder %s60, %s62
      %p69 = scmp.eq.s32.totalorder %s19, 1
      %p70 = por %p68, %p69
      %p71 = scmp.ne.s32.totalorder %s62, %s63
      %p72 = scmp.eq.s32.totalorder %s19, 0
      %p73 = por %p71, %p72
      %p74 = scmp.ne.s32.totalorder %s62, %s63
      %p75 = scmp.eq.s32.totalorder %s20, 1
      %p76 = por %p74, %p75
      %p78 = scmp.ne.s32.totalorder %s63, %s77
      %p79 = scmp.eq.s32.totalorder %s20, 0
      %p80 = por %p78, %p79
      %s82 = sadd.s32 %s81, 1
      %p85 = scmp.eq.s32.totalorder %s14, 1
      %p86 = scmp.ne.s32.totalorder %s81, %s83
      %p87 = scmp.eq.s32.totalorder %s14, 0
      %p88 = por %p86, %p87
      %p89 = scmp.ne.s32.totalorder %s81, %s83
      %p90 = scmp.eq.s32.totalorder %s19, 1
      %p91 = por %p89, %p90
      %p92 = scmp.ne.s32.totalorder %s83, %s84
      %p93 = scmp.eq.s32.totalorder %s19, 0
      %p94 = por %p92, %p93
      %p95 = scmp.ne.s32.totalorder %s83, %s84
      %p96 = scmp.eq.s32.totalorder %s20, 1
      %p97 = por %p95, %p96
      %p99 = scmp.ne.s32.totalorder %s84, %s98
      %p100 = scmp.eq.s32.totalorder %s20, 0
      %p101 = por %p99, %p100
      %s103 = sadd.s32 %s102, 1
      %p106 = scmp.eq.s32.totalorder %s14, 1
      %p107 = scmp.ne.s32.totalorder %s102, %s104
      %p108 = scmp.eq.s32.totalorder %s14, 0
      %p109 = por %p107, %p108
      %p110 = scmp.ne.s32.totalorder %s102, %s104
      %p111 = scmp.eq.s32.totalorder %s19, 1
      %p112 = por %p110, %p111
      %p113 = scmp.ne.s32.totalorder %s104, %s105
      %p114 = scmp.eq.s32.totalorder %s19, 0
      %p115 = por %p113, %p114
      %p116 = scmp.ne.s32.totalorder %s104, %s105
      %p117 = scmp.eq.s32.totalorder %s20, 1
      %p118 = por %p116, %p117
      %p120 = scmp.ne.s32.totalorder %s105, %s119
      %p121 = scmp.eq.s32.totalorder %s20, 0
      %p122 = por %p120, %p121
      %s124 = sadd.s32 %s123, 1
      %p127 = scmp.eq.s32.totalorder %s14, 1
      %p128 = scmp.ne.s32.totalorder %s123, %s125
      %p129 = scmp.eq.s32.totalorder %s14, 0
      %p130 = por %p128, %p129
      %p131 = scmp.ne.s32.totalorder %s123, %s125
      %p132 = scmp.eq.s32.totalorder %s19, 1
      %p133 = por %p131, %p132
      %p134 = scmp.ne.s32.totalorder %s125, %s126
      %p135 = scmp.eq.s32.totalorder %s19, 0
      %p136 = por %p134, %p135
      %p137 = scmp.ne.s32.totalorder %s125, %s126
      %p138 = scmp.eq.s32.totalorder %s20, 1
      %p139 = por %p137, %p138
      %p141 = scmp.ne.s32.totalorder %s126, %s140
      %p142 = scmp.eq.s32.totalorder %s20, 0
      %p143 = por %p141, %p142
      %s144 = ssub.s32 %s21, %s33
      %p145 = scmp.eq.s32.totalorder %s144, 0
      %s147 = sadd.s32 %s146, 1
      %s148 = scalar_select %p145, %s146, %s147
      %p151 = pneg %p145
      %p152 = scmp.eq.s32.totalorder %s14, 1
      %p153 = por %p151, %p152
      %p154 = scmp.ne.s32.totalorder %s146, %s149
      %p155 = scmp.eq.s32.totalorder %s14, 0
      %p156 = por %p154, %p155
      %p157 = scmp.ne.s32.totalorder %s146, %s149
      %p158 = scmp.eq.s32.totalorder %s19, 1
      %p159 = por %p157, %p158
      %p160 = scmp.ne.s32.totalorder %s149, %s150
      %p161 = scmp.eq.s32.totalorder %s19, 0
      %p162 = por %p160, %p161
      %p163 = scmp.ne.s32.totalorder %s149, %s150
      %p164 = scmp.eq.s32.totalorder %s20, 1
      %p165 = por %p163, %p164
      %p167 = scmp.ne.s32.totalorder %s150, %s166
      %p168 = scmp.eq.s32.totalorder %s20, 0
      %p169 = por %p167, %p168
      %p170 = scmp.le.s32.totalorder 1, %s14
      %p171 = scmp.lt.s32.totalorder %s14, 3
      %p172 = pnand %p170, %p171
      %p173 = pneg %p172
      // Predicated region
      $region9: #{_lambda_.3} parent=5 // pred_check
        _
      $region10: #{_lambda_.3} parent=5 // pred_check_branch
        %175 = sbr.rel (%p172) target = $region12
      $region11: #{_lambda_.3} parent=5 // pred_region
        %s176 = ssub.s32 %s14, 1
        // Predicated region
        $region13: #{_lambda_.3} parent=11 // pred_check
          %p177 = pneg %p73
        $region14: #{_lambda_.3} parent=11 // pred_check_branch
          %179 = sbr.rel (%p177) target = $region16
        $region15: #{_lambda_.3} parent=11 // pred_region
          _
        $region16: #{_lambda_.3} parent=11 // pred_fallthru
          _
        // Predicated region
        $region17: #{_lambda_.3} parent=11 // pred_check
          %p180 = pneg %p94
        $region18: #{_lambda_.3} parent=11 // pred_check_branch
          %182 = sbr.rel (%p180) target = $region20
        $region19: #{_lambda_.3} parent=11 // pred_region
          _
        $region20: #{_lambda_.3} parent=11 // pred_fallthru
          _
        // Predicated region
        $region21: #{_lambda_.3} parent=11 // pred_check
          %p183 = pneg %p115
        $region22: #{_lambda_.3} parent=11 // pred_check_branch
          %185 = sbr.rel (%p183) target = $region24
        $region23: #{_lambda_.3} parent=11 // pred_region
          _
        $region24: #{_lambda_.3} parent=11 // pred_fallthru
          _
        // Predicated region
        $region25: #{_lambda_.3} parent=11 // pred_check
          %p186 = pneg %p136
        $region26: #{_lambda_.3} parent=11 // pred_check_branch
          %188 = sbr.rel (%p186) target = $region28
        $region27: #{_lambda_.3} parent=11 // pred_region
          _
        $region28: #{_lambda_.3} parent=11 // pred_fallthru
          _
      $region12: #{_lambda_.3} parent=5 // pred_fallthru
        _
      %p189 = scmp.lt.s32.totalorder %s14, 2
      // Predicated region
      $region29: #{_lambda_.3} parent=5 // pred_check
        %p190 = pneg %p189
      $region30: #{_lambda_.3} parent=5 // pred_check_branch
        %192 = sbr.rel (%p190) target = $region32
      $region31: #{_lambda_.3} parent=5 // pred_region
        // Predicated region
        $region33: #{_lambda_.3} parent=31 // pred_check
          %p193 = pneg %p46
        $region34: #{_lambda_.3} parent=31 // pred_check_branch
          %195 = sbr.rel (%p193) target = $region36
        $region35: #{_lambda_.3} parent=31 // pred_region
          %p196 = scmp.lt.s32.totalorder %s21, 1
          %s197 = scalar_select %p196, %s21, 1
          %s198 = smul.addr %s197, 2
          %s199 = smul.addr %s198, 4
          %s200 = scalar_lea.vmem %s0, %s199
        $region36: #{_lambda_.3} parent=31 // pred_fallthru
          _
      $region32: #{_lambda_.3} parent=5 // pred_fallthru
        _
      %p201 = scmp.le.s32.totalorder 1, %s14
      %p202 = scmp.lt.s32.totalorder %s14, 3
      %p203 = pnand %p201, %p202
      %p204 = pneg %p203
      // Predicated region
      $region37: #{_lambda_.3} parent=5 // pred_check
        _
      $region38: #{_lambda_.3} parent=5 // pred_check_branch
        %206 = sbr.rel (%p203) target = $region40
      $region39: #{_lambda_.3} parent=5 // pred_region
        %s207 = ssub.s32 %s14, 1
        %p208 = scmp.lt.s32.totalorder %s23, 1
        %s209 = scalar_select %p208, %s23, 1
        %s210 = smul.addr %s209, 2
        %s211 = smul.addr %s210, 4
        %s212 = scalar_lea.vmem %s0, %s211
        %p213 = pneg %p52
        %p214 = pneg %p49
        %p215 = pneg %p73
        %p216 = pneg %p70
        %p217 = pneg %p94
        %p218 = pneg %p91
        %p219 = pneg %p115
        %p220 = pneg %p112
        %p221 = pneg %p136
        %p222 = pneg %p133
        %p223 = pneg %p162
        %p224 = pneg %p159
        %s225 = sand.u32 %s149, 1
        %s226 = scalar_lea.sflag [#allocation5], %s225
        %s227 = sand.u32 %s149, 1
        %s228 = scalar_lea.vmem [#allocation4], %s227
        %p229 = scmp.lt.s32.totalorder %s23, 1
        %s230 = scalar_select %p229, %s23, 1
        %s231 = smul.addr %s230, 2
        %s232 = smul.addr %s231, 4
        %s233 = scalar_lea.vmem %s0, %s232
        %p235 = scmp.eq.s32.totalorder %s24, 0
        // Predicated region
        $region41: #{_lambda_.3} parent=39 // pred_check
          %p236 = pneg %p235
        $region42: #{_lambda_.3} parent=39 // pred_check_branch
          %238 = sbr.rel (%p236) target = $region44
        $region43: #{_lambda_.3} parent=39 // pred_region
          %v239 = vld [vmem:[%s233] sm:$0xf]
          %v240 = vld [vmem:[%s233 + $0x4] sm:$0xf]
          %v243 = vunpack.c.l.b16 %v239
          %v244 = vunpack.c.l.b16 %v240
          %v245 = vpack.c.b16 %v244, %v243
          %v246 = vrot.slane %v245, 6
          %vm247 = vcmask 1041408
          %v250 = vsel %vm247, 0, %v246
          %v252 = vunpack.c.l.b16 %v250
          %v253 = vunpack.c.h.b16 %v250
          %v254 = vunpack.c.l.b16 %v246
          %v255 = vpack.c.b16 %v252, %v252
          %v256 = vpack.c.b16 %v253, %v253
          %v257 = vpack.c.b16 %v254, %v254
          %261 = vst [vmem:[#allocation2] sm:$0xf] %v255
          %262 = vst [vmem:[#allocation2 + $0x4] sm:$0xf] %v256
          %263 = vst [vmem:[#allocation2 + $0x8] sm:$0x3] %v257
        $region44: #{_lambda_.3} parent=39 // pred_fallthru
          _
        %v264 = vld [vmem:[#allocation2] sm:$0xf]
        %v265 = vld [vmem:[#allocation2 + $0x4] sm:$0xf]
        %v266 = vld [vmem:[#allocation2] sm:$0xe]
        %v267 = vld [vmem:[#allocation2 + $0x8] sm:$0x1]
        %v268 = vld [vmem:[#allocation2] sm:$0xc]
        %v269 = vld [vmem:[#allocation2 + $0x8] sm:$0x3]
        %v272 = vunpack.c.l.b16 %v264
        %v273 = vunpack.c.l.b16 %v265
        %v274 = vpack.c.b16 %v273, %v272
        %v278 = vunpack.c.l.b16 %v266
        %v279 = vunpack.c.l.b16 %v267
        %v280 = vpack.c.b16 %v273, %v278
        %v281 = vpack.c.b16 %v279, %v279
        %vm282 = vcmask 1046528
        %v283 = vrot.slane %v280, 1
        %v284 = vrot.slane %v281, 1
        %v285 = vsel %vm282, %v283, %v284
        %v289 = vunpack.c.l.b16 %v268
        %v290 = vunpack.c.l.b16 %v269
        %v291 = vpack.c.b16 %v273, %v289
        %v292 = vpack.c.b16 %v290, %v290
        %vm293 = vcmask 1045504
        %v294 = vrot.slane %v291, 2
        %v295 = vrot.slane %v292, 2
        %v296 = vsel %vm293, %v294, %v295
        %v298 = vld [vmem:[%s1] sm:$0xf]
        %v299 = vld [vmem:[%s1 + $0x4] sm:$0xf]
        %v300 = vld [vmem:[%s1 + $0x8] sm:$0xf]
        %v301 = vld [vmem:[%s1 + $0xc] sm:$0xf]
        %v302 = vld [vmem:[%s1 + $0x10] sm:$0xf]
        %v303 = vld [vmem:[%s1 + $0x14] sm:$0xf]
        %v304 = vld [vmem:[%s1 + $0x18] sm:$0xf]
        %v305 = vld [vmem:[%s1 + $0x1c] sm:$0xf]
        %v306 = vld [vmem:[%s1 + $0x20] sm:$0xf]
        %v307 = vld [vmem:[%s1 + $0x24] sm:$0xf]
        %v308 = vld [vmem:[%s1 + $0x28] sm:$0xf]
        %v309 = vld [vmem:[%s1 + $0x2c] sm:$0xf]
        %v310 = vld [vmem:[%s1 + $0x30] sm:$0xf]
        %v311 = vld [vmem:[%s1 + $0x34] sm:$0xf]
        %v312 = vld [vmem:[%s1 + $0x38] sm:$0xf]
        %v313 = vld [vmem:[%s1 + $0x3c] sm:$0xf]
        %v314 = vld [vmem:[%s1 + $0x40] sm:$0xf]
        %v315 = vld [vmem:[%s1 + $0x44] sm:$0xf]
        %v316 = vld [vmem:[%s1 + $0x48] sm:$0xf]
        %v317 = vld [vmem:[%s1 + $0x4c] sm:$0xf]
        %v318 = vld [vmem:[%s1 + $0x50] sm:$0xf]
        %v319 = vld [vmem:[%s1 + $0x54] sm:$0xf]
        %v320 = vld [vmem:[%s1 + $0x58] sm:$0xf]
        %v321 = vld [vmem:[%s1 + $0x5c] sm:$0xf]
        %v322 = vld [vmem:[%s1 + $0x60] sm:$0xf]
        %v323 = vld [vmem:[%s1 + $0x64] sm:$0xf]
        %v324 = vld [vmem:[%s1 + $0x68] sm:$0xf]
        %v325 = vld [vmem:[%s1 + $0x6c] sm:$0xf]
        %v326 = vld [vmem:[%s1 + $0x70] sm:$0xf]
        %v327 = vld [vmem:[%s1 + $0x74] sm:$0xf]
        %v328 = vld [vmem:[%s1 + $0x78] sm:$0xf]
        %v329 = vld [vmem:[%s1 + $0x7c] sm:$0xf]
        %v330 = vld [vmem:[%s1 + $0x80] sm:$0xf]
        %v331 = vld [vmem:[%s1 + $0x84] sm:$0xf]
        %v332 = vld [vmem:[%s1 + $0x88] sm:$0xf]
        %v333 = vld [vmem:[%s1 + $0x8c] sm:$0xf]
        %v334 = vld [vmem:[%s1 + $0x90] sm:$0xf]
        %v335 = vld [vmem:[%s1 + $0x94] sm:$0xf]
        %v336 = vld [vmem:[%s1 + $0x98] sm:$0xf]
        %v337 = vld [vmem:[%s1 + $0x9c] sm:$0xf]
        %v338 = vld [vmem:[%s1 + $0xa0] sm:$0xf]
        %v339 = vld [vmem:[%s1 + $0xa4] sm:$0xf]
        %v340 = vld [vmem:[%s1 + $0xa8] sm:$0xf]
        %v341 = vld [vmem:[%s1 + $0xac] sm:$0xf]
        %v342 = vld [vmem:[%s1 + $0xb0] sm:$0xf]
        %v343 = vld [vmem:[%s1 + $0xb4] sm:$0xf]
        %v344 = vld [vmem:[%s1 + $0xb8] sm:$0xf]
        %v345 = vld [vmem:[%s1 + $0xbc] sm:$0xf]
        %v346 = vld [vmem:[%s2] sm:$0x1]
        %v348 = vlaneseq
        %v349 = vshrl.u32 %v348, 7
        %v350 = vsub.s32 0, %v349
        %v351 = vrot.slane %v346, %v350
        %v401 = vunpack.c.l.b16 %v298
        %v402 = vunpack.c.l.b16 %v299
        %v403 = vunpack.c.l.b16 %v300
        %v404 = vunpack.c.l.b16 %v301
        %v405 = vunpack.c.l.b16 %v302
        %v406 = vunpack.c.l.b16 %v303
        %v407 = vunpack.c.l.b16 %v304
        %v408 = vunpack.c.l.b16 %v305
        %v409 = vunpack.c.l.b16 %v306
        %v410 = vunpack.c.l.b16 %v307
        %v411 = vunpack.c.l.b16 %v308
        %v412 = vunpack.c.l.b16 %v309
        %v413 = vunpack.c.l.b16 %v310
        %v414 = vunpack.c.l.b16 %v311
        %v415 = vunpack.c.l.b16 %v312
        %v416 = vunpack.c.l.b16 %v313
        %v417 = vunpack.c.l.b16 %v314
        %v418 = vunpack.c.l.b16 %v315
        %v419 = vunpack.c.l.b16 %v316
        %v420 = vunpack.c.l.b16 %v317
        %v421 = vunpack.c.l.b16 %v318
        %v422 = vunpack.c.l.b16 %v319
        %v423 = vunpack.c.l.b16 %v320
        %v424 = vunpack.c.l.b16 %v321
        %v425 = vunpack.c.l.b16 %v322
        %v426 = vunpack.c.l.b16 %v323
        %v427 = vunpack.c.l.b16 %v324
        %v428 = vunpack.c.l.b16 %v325
        %v429 = vunpack.c.l.b16 %v326
        %v430 = vunpack.c.l.b16 %v327
        %v431 = vunpack.c.l.b16 %v328
        %v432 = vunpack.c.l.b16 %v329
        %v433 = vunpack.c.l.b16 %v330
        %v434 = vunpack.c.l.b16 %v331
        %v435 = vunpack.c.l.b16 %v332
        %v436 = vunpack.c.l.b16 %v333
        %v437 = vunpack.c.l.b16 %v334
        %v438 = vunpack.c.l.b16 %v335
        %v439 = vunpack.c.l.b16 %v336
        %v440 = vunpack.c.l.b16 %v337
        %v441 = vunpack.c.l.b16 %v338
        %v442 = vunpack.c.l.b16 %v339
        %v443 = vunpack.c.l.b16 %v340
        %v444 = vunpack.c.l.b16 %v341
        %v445 = vunpack.c.l.b16 %v342
        %v446 = vunpack.c.l.b16 %v343
        %v447 = vunpack.c.l.b16 %v344
        %v448 = vunpack.c.l.b16 %v345
        %v449 = vpack.c.b16 %v402, %v401
        %v450 = vpack.c.b16 %v404, %v403
        %v451 = vpack.c.b16 %v406, %v405
        %v452 = vpack.c.b16 %v408, %v407
        %v453 = vpack.c.b16 %v410, %v409
        %v454 = vpack.c.b16 %v412, %v411
        %v455 = vpack.c.b16 %v414, %v413
        %v456 = vpack.c.b16 %v416, %v415
        %v457 = vpack.c.b16 %v418, %v417
        %v458 = vpack.c.b16 %v420, %v419
        %v459 = vpack.c.b16 %v422, %v421
        %v460 = vpack.c.b16 %v424, %v423
        %v461 = vpack.c.b16 %v426, %v425
        %v462 = vpack.c.b16 %v428, %v427
        %v463 = vpack.c.b16 %v430, %v429
        %v464 = vpack.c.b16 %v432, %v431
        %v465 = vpack.c.b16 %v434, %v433
        %v466 = vpack.c.b16 %v436, %v435
        %v467 = vpack.c.b16 %v438, %v437
        %v468 = vpack.c.b16 %v440, %v439
        %v469 = vpack.c.b16 %v442, %v441
        %v470 = vpack.c.b16 %v444, %v443
        %v471 = vpack.c.b16 %v446, %v445
        %v472 = vpack.c.b16 %v448, %v447
        %497 = vmatprep.subr.bf16.mxu0 0
        %498 = vmatpush1.bf16.msra.mxu0 %v456
        %499 = vmatprep.subr.bf16.mxu0 0
        %500 = vmatpush1.bf16.msra.mxu0 %v455
        %501 = vmatprep.subr.bf16.mxu0 0
        %502 = vmatpush1.bf16.msra.mxu0 %v454
        %503 = vmatprep.subr.bf16.mxu0 0
        %504 = vmatpush1.bf16.msra.mxu0 %v453
        %505 = vmatprep.subr.bf16.mxu0 0
        %506 = vmatpush1.bf16.msra.mxu0 %v452
        %507 = vmatprep.subr.bf16.mxu0 0
        %508 = vmatpush1.bf16.msra.mxu0 %v451
        %509 = vmatprep.subr.bf16.mxu0 0
        %510 = vmatpush1.bf16.msra.mxu0 %v450
        %511 = vmatprep.subr.bf16.mxu0 0
        %512 = vmatpush1.bf16.msra.mxu0 %v449
        %513 = vmatprep.subr.bf16.mxu0 0
        %514 = vmatpush2.bf16.msra.mxu0 %v464
        %515 = vmatprep.subr.bf16.mxu0 0
        %516 = vmatpush2.bf16.msra.mxu0 %v463
        %517 = vmatprep.subr.bf16.mxu0 0
        %518 = vmatpush2.bf16.msra.mxu0 %v462
        %519 = vmatprep.subr.bf16.mxu0 0
        %520 = vmatpush2.bf16.msra.mxu0 %v461
        %521 = vmatprep.subr.bf16.mxu0 0
        %522 = vmatpush2.bf16.msra.mxu0 %v460
        %523 = vmatprep.subr.bf16.mxu0 0
        %524 = vmatpush2.bf16.msra.mxu0 %v459
        %525 = vmatprep.subr.bf16.mxu0 0
        %526 = vmatpush2.bf16.msra.mxu0 %v458
        %527 = vmatprep.subr.bf16.mxu0 0
        %528 = vmatpush2.bf16.msra.mxu0 %v457
        %529 = vmatprep.mubr.bf16.mxu0 %v285
        %530 = vmatmul.mubr.bf16.gmra.mxu0 %v274
        %v531 = vpop.f32.mrf.mxu0
        %v532 = vadd.f32 %v351, %v531
        %v533 = vpop.f32.mrf.mxu0
        %v534 = vpop.f32.mrf.mxu0
        %v535 = vadd.f32 %v351, %v534
        %v536 = vpop.f32.mrf.mxu0
        %537 = vdwg.mxu0
        %538 = vmatprep.subr.bf16.mxu0 0
        %539 = vmatpush1.bf16.msra.mxu0 %v472
        %540 = vmatprep.subr.bf16.mxu0 0
        %541 = vmatpush1.bf16.msra.mxu0 %v471
        %542 = vmatprep.subr.bf16.mxu0 0
        %543 = vmatpush1.bf16.msra.mxu0 %v470
        %544 = vmatprep.subr.bf16.mxu0 0
        %545 = vmatpush1.bf16.msra.mxu0 %v469
        %546 = vmatprep.subr.bf16.mxu0 0
        %547 = vmatpush1.bf16.msra.mxu0 %v468
        %548 = vmatprep.subr.bf16.mxu0 0
        %549 = vmatpush1.bf16.msra.mxu0 %v467
        %550 = vmatprep.subr.bf16.mxu0 0
        %551 = vmatpush1.bf16.msra.mxu0 %v466
        %552 = vmatprep.subr.bf16.mxu0 0
        %553 = vmatpush1.bf16.msra.mxu0 %v465
        %554 = vmatprep.subr.bf16.mxu0 0
        %555 = vmatpush2.bf16.msra.mxu0 0
        %556 = vmatprep.subr.bf16.mxu0 0
        %557 = vmatpush2.bf16.msra.mxu0 0
        %558 = vmatprep.subr.bf16.mxu0 0
        %559 = vmatpush2.bf16.msra.mxu0 0
        %560 = vmatprep.subr.bf16.mxu0 0
        %561 = vmatpush2.bf16.msra.mxu0 0
        %562 = vmatprep.subr.bf16.mxu0 0
        %563 = vmatpush2.bf16.msra.mxu0 0
        %564 = vmatprep.subr.bf16.mxu0 0
        %565 = vmatpush2.bf16.msra.mxu0 0
        %566 = vmatprep.subr.bf16.mxu0 0
        %567 = vmatpush2.bf16.msra.mxu0 0
        %568 = vmatprep.subr.bf16.mxu0 0
        %569 = vmatpush2.bf16.msra.mxu0 0
        %570 = vmatprep.mubr.bf16.mxu0 0
        %571 = vmatmul.mubr.bf16.gmra.mxu0 %v296
        %v572 = vpop.f32.mrf.mxu0
        %v573 = vadd.f32 %v532, %v572
        %v574 = vpop.f32.mrf.mxu0
        %v575 = vpop.f32.mrf.mxu0
        %v576 = vadd.f32 %v535, %v575
        %v577 = vpop.f32.mrf.mxu0
        %578 = vdwg.mxu0
        %v579 = vmax.f32 %v573, 0.0
        %v580 = vmax.f32 %v576, 0.0
        %v581 = vld [vmem:[%s3] sm:$0xf]
        %v582 = vld [vmem:[%s3 + $0x4] sm:$0xf]
        %v583 = vld [vmem:[%s3 + $0x8] sm:$0xf]
        %v584 = vld [vmem:[%s3 + $0xc] sm:$0xf]
        %v585 = vld [vmem:[%s3 + $0x10] sm:$0xf]
        %v586 = vld [vmem:[%s3 + $0x14] sm:$0xf]
        %v587 = vld [vmem:[%s3 + $0x18] sm:$0xf]
        %v588 = vld [vmem:[%s3 + $0x1c] sm:$0xf]
        %v589 = vld [vmem:[%s3 + $0x20] sm:$0xf]
        %v590 = vld [vmem:[%s3 + $0x24] sm:$0xf]
        %v591 = vld [vmem:[%s3 + $0x28] sm:$0xf]
        %v592 = vld [vmem:[%s3 + $0x2c] sm:$0xf]
        %v593 = vld [vmem:[%s3 + $0x30] sm:$0xf]
        %v594 = vld [vmem:[%s3 + $0x34] sm:$0xf]
        %v595 = vld [vmem:[%s3 + $0x38] sm:$0xf]
        %v596 = vld [vmem:[%s3 + $0x3c] sm:$0xf]
        %v597 = vld [vmem:[%s4] sm:$0x1]
        %v599 = vlaneseq
        %v600 = vshrl.u32 %v599, 7
        %v601 = vsub.s32 0, %v600
        %v602 = vrot.slane %v597, %v601
        %v620 = vunpack.c.l.b16 %v581
        %v621 = vunpack.c.l.b16 %v582
        %v622 = vunpack.c.l.b16 %v583
        %v623 = vunpack.c.l.b16 %v584
        %v624 = vunpack.c.l.b16 %v585
        %v625 = vunpack.c.l.b16 %v586
        %v626 = vunpack.c.l.b16 %v587
        %v627 = vunpack.c.l.b16 %v588
        %v628 = vunpack.c.l.b16 %v589
        %v629 = vunpack.c.l.b16 %v590
        %v630 = vunpack.c.l.b16 %v591
        %v631 = vunpack.c.l.b16 %v592
        %v632 = vunpack.c.l.b16 %v593
        %v633 = vunpack.c.l.b16 %v594
        %v634 = vunpack.c.l.b16 %v595
        %v635 = vunpack.c.l.b16 %v596
        %v636 = vpack.c.b16 %v621, %v620
        %v637 = vpack.c.b16 %v623, %v622
        %v638 = vpack.c.b16 %v625, %v624
        %v639 = vpack.c.b16 %v627, %v626
        %v640 = vpack.c.b16 %v629, %v628
        %v641 = vpack.c.b16 %v631, %v630
        %v642 = vpack.c.b16 %v633, %v632
        %v643 = vpack.c.b16 %v635, %v634
        %652 = vmatprep.subr.bf16.mxu0 0
        %653 = vmatpush1.bf16.msra.mxu0 %v643
        %654 = vmatprep.subr.bf16.mxu0 0
        %655 = vmatpush1.bf16.msra.mxu0 %v642
        %656 = vmatprep.subr.bf16.mxu0 0
        %657 = vmatpush1.bf16.msra.mxu0 %v641
        %658 = vmatprep.subr.bf16.mxu0 0
        %659 = vmatpush1.bf16.msra.mxu0 %v640
        %660 = vmatprep.subr.bf16.mxu0 0
        %661 = vmatpush1.bf16.msra.mxu0 %v639
        %662 = vmatprep.subr.bf16.mxu0 0
        %663 = vmatpush1.bf16.msra.mxu0 %v638
        %664 = vmatprep.subr.bf16.mxu0 0
        %665 = vmatpush1.bf16.msra.mxu0 %v637
        %666 = vmatprep.subr.bf16.mxu0 0
        %667 = vmatpush1.bf16.msra.mxu0 %v636
        %668 = vmatprep.subr.bf16.mxu0 0
        %669 = vmatpush2.bf16.msra.mxu0 0
        %670 = vmatprep.subr.bf16.mxu0 0
        %671 = vmatpush2.bf16.msra.mxu0 0
        %672 = vmatprep.subr.bf16.mxu0 0
        %673 = vmatpush2.bf16.msra.mxu0 0
        %674 = vmatprep.subr.bf16.mxu0 0
        %675 = vmatpush2.bf16.msra.mxu0 0
        %676 = vmatprep.subr.bf16.mxu0 0
        %677 = vmatpush2.bf16.msra.mxu0 0
        %678 = vmatprep.subr.bf16.mxu0 0
        %679 = vmatpush2.bf16.msra.mxu0 0
        %680 = vmatprep.subr.bf16.mxu0 0
        %681 = vmatpush2.bf16.msra.mxu0 0
        %682 = vmatprep.subr.bf16.mxu0 0
        %683 = vmatpush2.bf16.msra.mxu0 0
        %684 = vmatprep.mubr.bf16.mxu0 0
        %685 = vmatmul.mubr.bf16.gmra.mxu0 %v296
        %v686 = vpop.f32.mrf.mxu0
        %v687 = vadd.f32 %v602, %v686
        %v688 = vpop.f32.mrf.mxu0
        %v689 = vpop.f32.mrf.mxu0
        %v690 = vadd.f32 %v602, %v689
        %v691 = vpop.f32.mrf.mxu0
        %692 = vdwg.mxu0
        %v693 = vadd.f32 %v579, %v687
        %v694 = vadd.f32 %v580, %v690
        // Predicated region
        $region45: #{_lambda_.3} parent=39 // pred_check
          %p695 = pneg %p235
        $region46: #{_lambda_.3} parent=39 // pred_check_branch
          %697 = sbr.rel (%p695) target = $region48
        $region47: #{_lambda_.3} parent=39 // pred_region
          %698 = vst [vmem:[#allocation3] sm:$0x1] 0.0
        $region48: #{_lambda_.3} parent=39 // pred_fallthru
          _
        %v699 = vld [vmem:[#allocation3] sm:$0x1]
        %v700 = vadd.f32 %v693, %v694
        %v701 = vrot.slane %v700, 4
        %v702 = vadd.f32 %v700, %v701
        %v703 = vrot.slane %v702, 2
        %v704 = vadd.f32 %v702, %v703
        %v705 = vrot.slane %v704, 1
        %v706 = vadd.f32 %v704, %v705
        %v707 = vadd.f32 %v699, %v706
        %708 = vst [vmem:[#allocation3] sm:$0x1] %v707
        // Predicated region
        $region49: #{_lambda_.3} parent=39 // pred_check
          %p709 = pneg %p235
        $region50: #{_lambda_.3} parent=39 // pred_check_branch
          %711 = sbr.rel (%p709) target = $region52
        $region51: #{_lambda_.3} parent=39 // pred_region
          %v712 = vld [vmem:[#allocation3] sm:$0x1]
          %v713 = vmul.f32 %v712, 0.0625
          %714 = vst [vmem:[%s228] sm:$0x1] %v713
        $region52: #{_lambda_.3} parent=39 // pred_fallthru
          _
        %s715 = sand.u32 %s149, 1
        %s716 = scalar_lea.sflag [#allocation5], %s715
        %s717 = sand.u32 %s149, 1
        %s718 = scalar_lea.vmem [#allocation4], %s717
        // Predicated region
        $region53: #{_lambda_.3} parent=39 // pred_check
          %p719 = pneg %p159
        $region54: #{_lambda_.3} parent=39 // pred_check_branch
          %721 = sbr.rel (%p719) target = $region56
        $region55: #{_lambda_.3} parent=39 // pred_region
          %s723 = ssub.s32 16, 16
          %724 = vsyncadd %s716, %s723
          %s725 = smul.addr %s23, 16
          %s726 = scalar_lea.hbm %s5, %s725
          %s728 = sshll.u32 %s718, 4
          %s729 = int_to_ptr.vmem [resolvable:$true] %s728
          %731 = dma.vmem_to_hbm [thread:$0]  %s729, 16, %s726, %s716
        $region56: #{_lambda_.3} parent=39 // pred_fallthru
          _
      $region40: #{_lambda_.3} parent=5 // pred_fallthru
        _
      %p732 = scmp.le.s32.totalorder 2, %s14
      // Predicated region
      $region57: #{_lambda_.3} parent=5 // pred_check
        %p733 = pneg %p732
      $region58: #{_lambda_.3} parent=5 // pred_check_branch
        %735 = sbr.rel (%p733) target = $region60
      $region59: #{_lambda_.3} parent=5 // pred_region
        %s736 = ssub.s32 %s14, 2
        // Predicated region
        $region61: #{_lambda_.3} parent=59 // pred_check
          %p737 = pneg %p165
        $region62: #{_lambda_.3} parent=59 // pred_check_branch
          %739 = sbr.rel (%p737) target = $region64
        $region63: #{_lambda_.3} parent=59 // pred_region
          %s740 = sand.u32 %s150, 1
          %s741 = scalar_lea.sflag [#allocation5], %s740
          %s742 = sand.u32 %s150, 1
          %s743 = scalar_lea.vmem [#allocation4], %s742
          %744 = dma.done %s741, 16
        $region64: #{_lambda_.3} parent=59 // pred_fallthru
          _
      $region60: #{_lambda_.3} parent=5 // pred_fallthru
        _
    $region6: #{_lambda_.3} parent=1 // loop_footer
      %s18 = sadd.s32 1, %s14
    $region7: #{_lambda_.3} parent=1 // loop_footer_branch
      %13 = sbr.rel target = $region3
    $region8: #{_lambda_.3} parent=1 // loop_exit
      _
    %745 = vsyncpa [#allocation5], 1
    %s746 = scalar_lea.sflag [#allocation5], 1
    %747 = vsyncpa %s746, 1

</llo_original>
